<compile_context>
chip_gen: v5e
topology: v5e:2x2
jax: 0.10.0
libtpu: 0.0.40
codegen_flags: <defaults>
</compile_context>

<pallas_src>
import functools

import jax
import jax.numpy as jnp
from jax import lax
from jax.experimental import pallas as pl
from jax.experimental.pallas import tpu as pltpu

BN_EPS = 1e-5
LEAKY_SLOPE = 0.1
IN_FEATURES = 256 * 4 * 4   # 4096
HIDDEN = 128
HEAD_LANES = 128            # fused head output width, zero-padded to a full lane tile


def _round_up(n, m):
    return ((n + m - 1) // m) * m


# --------------------------------- Pass 1 ----------------------------------------

def _linear_stats_kernel(x_ref, w1_ref, h_ref, sum_ref, sq_ref, *, tb, nb, nbh, batch):
    """h = x @ w1 (bf16 in, f32 acc) + per-core batch sum / sum-of-squares."""
    c = pl.program_id(0)          # core split ("parallel")
    j = pl.program_id(1)          # batch tiles within the split ("arbitrary")

    @pl.when(j == 0)
    def _():
        sum_ref[...] = jnp.zeros_like(sum_ref)
        sq_ref[...] = jnp.zeros_like(sq_ref)

    # In-kernel bf16 cast: free VPU filler under the x DMA shadow; no-op if x is bf16.
    x = x_ref[...].astype(jnp.bfloat16)
    h = jnp.dot(x, w1_ref[...], preferred_element_type=jnp.float32)     # (tb, 128) f32
    h_ref[...] = h.astype(h_ref.dtype)                                  # bf16 writeback

    # Mask rows of the ragged last tile and any clamped duplicate tile so padded /
    # recomputed rows never contaminate the batch statistics.
    lin = c * nbh + j
    rows = lin * tb + lax.broadcasted_iota(jnp.int32, (tb, 1), 0)
    valid = (lin < nb) & (rows < batch)
    hm = jnp.where(valid, h, 0.0)
    sum_ref[...] += jnp.sum(hm, axis=0, keepdims=True)
    sq_ref[...] += jnp.sum(hm * hm, axis=0, keepdims=True)


# --------------------------------- Pass 2 ----------------------------------------

def _heads_kernel(scale_ref, shift_ref, wh_ref, bh_ref, h_ref, out_ref,
                  *, cat_dims, cont_dims):
    """Folded BN + LeakyReLU + fused bf16 head matmul + softmax/exp, lane-dense out."""
    h = h_ref[...].astype(jnp.float32)                       # (TB, 128)
    a = h * scale_ref[...] + shift_ref[...]                  # BatchNorm folded to scale/shift
    act = jnp.where(a > 0, a, LEAKY_SLOPE * a)               # LeakyReLU(0.1)

    # One lane-padded bf16 matmul for all three heads, f32 accumulation.
    z = jnp.dot(act.astype(jnp.bfloat16), wh_ref[...],
                preferred_element_type=jnp.float32) + bh_ref[...]

    col = lax.broadcasted_iota(jnp.int32, z.shape, 1)
    mu_end = cat_dims + cont_dims
    sig_end = cat_dims + 2 * cont_dims
    is_cat = col < cat_dims
    is_mu = (col >= cat_dims) & (col < mu_end)
    is_sig = (col >= mu_end) & (col < sig_end)

    # Single exp serves both the softmax numerator (cat lanes, shifted by the row max)
    # and exp(z) for the sigma lanes. Overflow on unused lanes is masked away below.
    m = jnp.max(jnp.where(is_cat, z, -jnp.inf), axis=-1, keepdims=True)
    e = jnp.exp(z - jnp.where(is_cat, m, 0.0))
    denom = jnp.sum(jnp.where(is_cat, e, 0.0), axis=-1, keepdims=True)
    cat = e / denom                                           # exact divide (log-prob safe)

    out_ref[...] = jnp.where(is_cat, cat,
                             jnp.where(is_mu, z,
                                       jnp.where(is_sig, e, 0.0)))


# --------------------------------- Wrapper ----------------------------------------

@functools.partial(jax.jit, static_argnames=("cat_dims", "cont_dims"))
def recognition_forward(x, params, cat_dims, cont_dims):
    """x: (B, 4096) flattened conv features (f32 or bf16). Returns (cat, mu, sigma)."""
    B = x.shape[0]
    assert x.shape[1] == IN_FEATURES
    assert cat_dims >= 1 and cat_dims + 2 * cont_dims <= HEAD_LANES

    # ---- Pass 1: tiled Linear(4096 -> 128) + batch statistics -----------------------
    tb = min(_round_up(B, 8), 512)           # big, HBM-roofline-friendly tiles
    nb = pl.cdiv(B, tb)
    ncs = 2 if nb >= 2 else 1                # shard the batch loop across 2 TCs (v7x)
    nbh = pl.cdiv(nb, ncs)

    def xh_map(c, j):
        # Clamp so a phantom trailing step (odd nb) re-reads/re-writes the last tile
        # with identical values; its stats contribution is masked out in-kernel.
        return (jnp.minimum(c * nbh + j, nb - 1), 0)

    h, s1, s2 = pl.pallas_call(
        functools.partial(_linear_stats_kernel, tb=tb, nb=nb, nbh=nbh, batch=B),
        out_shape=(
            jax.ShapeDtypeStruct((B, HIDDEN), jnp.bfloat16),     # bf16 h halves the round trip
            jax.ShapeDtypeStruct((ncs, 1, HIDDEN), jnp.float32),  # per-core partial sums
            jax.ShapeDtypeStruct((ncs, 1, HIDDEN), jnp.float32),  # per-core partial sumsq
        ),
        grid_spec=pltpu.PrefetchScalarGridSpec(
            num_scalar_prefetch=0,
            grid=(ncs, nbh),
            in_specs=[
                pl.BlockSpec((tb, IN_FEATURES), xh_map),                     # x tile
                pl.BlockSpec((IN_FEATURES, HIDDEN), lambda c, j: (0, 0),
                             pipeline_mode=pl.Buffered(1)),                  # resident W1
            ],
            out_specs=[
                pl.BlockSpec((tb, HIDDEN), xh_map),                          # h tile
                pl.BlockSpec((None, 1, HIDDEN), lambda c, j: (c, 0, 0)),     # sum accumulator
                pl.BlockSpec((None, 1, HIDDEN), lambda c, j: (c, 0, 0)),     # sumsq accumulator
            ],
        ),
        compiler_params=pltpu.CompilerParams(
            dimension_semantics=("parallel", "arbitrary"),
            vmem_limit_bytes=48 * 1024 * 1024,
        ),
    )(x, params["w1"])

    # ---- Fold BatchNorm (batch stats, biased variance) into scale/shift (tiny XLA) --
    # TODO(synk): E[h^2]-E[h]^2 can lose precision if |mean| >> std; acceptable here.
    s1t = jnp.sum(s1, axis=0)                # (1, HIDDEN)
    s2t = jnp.sum(s2, axis=0)
    inv_b = jnp.float32(1.0 / B)
    mean = s1t * inv_b
    var = jnp.maximum(s2t * inv_b - mean * mean, 0.0)
    scale = params["gamma"] * lax.rsqrt(var + BN_EPS)
    shift = params["beta"] - mean * scale

    # ---- Pass 2: BN + LeakyReLU + fused lane-padded heads (decoupled, big tile) -----
    tb2 = min(_round_up(B, 8), 2048)
    nb2 = pl.cdiv(B, tb2)

    slab = pl.pallas_call(
        functools.partial(_heads_kernel, cat_dims=cat_dims, cont_dims=cont_dims),
        out_shape=jax.ShapeDtypeStruct((B, HEAD_LANES), jnp.float32),
        grid_spec=pltpu.PrefetchScalarGridSpec(
            num_scalar_prefetch=0,
            grid=(nb2,),
            in_specs=[
                pl.BlockSpec((1, HIDDEN), lambda i: (0, 0),
                             pipeline_mode=pl.Buffered(1)),                   # scale
                pl.BlockSpec((1, HIDDEN), lambda i: (0, 0),
                             pipeline_mode=pl.Buffered(1)),                   # shift
                pl.BlockSpec((HIDDEN, HEAD_LANES), lambda i: (0, 0),
                             pipeline_mode=pl.Buffered(1)),                   # fused head weights
                pl.BlockSpec((1, HEAD_LANES), lambda i: (0, 0),
                             pipeline_mode=pl.Buffered(1)),                   # fused head bias
                pl.BlockSpec((tb2, HIDDEN), lambda i: (i, 0)),                # h tile
            ],
            out_specs=pl.BlockSpec((tb2, HEAD_LANES), lambda i: (i, 0)),      # lane-dense slab
        ),
        compiler_params=pltpu.CompilerParams(
            dimension_semantics=("parallel",),
            vmem_limit_bytes=32 * 1024 * 1024,
        ),
    )(scale, shift, params["w_heads"], params["b_heads"], h)

    cat = jnp.squeeze(slab[:, :cat_dims])
    if cont_dims > 0:
        mu = jnp.squeeze(slab[:, cat_dims:cat_dims + cont_dims])
        sigma = jnp.squeeze(slab[:, cat_dims + cont_dims:cat_dims + 2 * cont_dims])
        return cat, mu, sigma
    return cat, None, None


# ------------------------------ Params / reference ---------------------------------

def init_params(key, cat_dims, cont_dims):
    """Deterministic synthetic parameters matching nn.Linear default init scale."""
    def linear(k, fan_in, fan_out):
        kw, kb = jax.random.split(k)
        bound = 1.0 / jnp.sqrt(fan_in)
        w = jax.random.uniform(kw, (fan_in, fan_out), jnp.float32, -bound, bound)
        b = jax.random.uniform(kb, (1, fan_out), jnp.float32, -bound, bound)
        return w, b

    k1, k2, k3, k4 = jax.random.split(key, 4)
    w1, b1 = linear(k1, IN_FEATURES, HIDDEN)
    wc, bc = linear(k2, HIDDEN, cat_dims)
    wm, bm = linear(k3, HIDDEN, cont_dims)
    ws, bs = linear(k4, HIDDEN, cont_dims)

    # Pack the three head Linears into one lane-padded (128,128) weight / (1,128) bias.
    w_heads = jnp.zeros((HIDDEN, HEAD_LANES), jnp.float32)
    b_heads = jnp.zeros((1, HEAD_LANES), jnp.float32)
    w_heads = w_heads.at[:, :cat_dims].set(wc)
    b_heads = b_heads.at[:, :cat_dims].set(bc)
    w_heads = w_heads.at[:, cat_dims:cat_dims + cont_dims].set(wm)
    b_heads = b_heads.at[:, cat_dims:cat_dims + cont_dims].set(bm)
    w_heads = w_heads.at[:, cat_dims + cont_dims:cat_dims + 2 * cont_dims].set(ws)
    b_heads = b_heads.at[:, cat_dims + cont_dims:cat_dims + 2 * cont_dims].set(bs)

    return {
        "w1": w1.astype(jnp.bfloat16),        # bf16 storage halves the resident weight
        "b1": b1,                             # kept for fidelity; cancelled by batch-stat BN
        "gamma": jnp.ones((1, HIDDEN), jnp.float32),
        "beta": jnp.zeros((1, HIDDEN), jnp.float32),
        "w_heads": w_heads.astype(jnp.bfloat16),
        "b_heads": b_heads,
    }


def reference_forward(x, params, cat_dims, cont_dims):
    """Pure-JAX reference (includes the b1 bias to demonstrate it cancels under BN)."""
    w1 = params["w1"].astype(jnp.float32)
    wh = params["w_heads"].astype(jnp.float32)
    h = x @ w1 + params["b1"]
    mean = jnp.mean(h, axis=0, keepdims=True)
    var = jnp.mean((h - mean) ** 2, axis=0, keepdims=True)
    h_bn = (h - mean) * lax.rsqrt(var + BN_EPS) * params["gamma"] + params["beta"]
    out = jnp.where(h_bn > 0, h_bn, LEAKY_SLOPE * h_bn)
    z = out @ wh + params["b_heads"]
    cat = jax.nn.softmax(z[:, :cat_dims], axis=-1)
    mu = z[:, cat_dims:cat_dims + cont_dims]
    sigma = jnp.exp(z[:, cat_dims + cont_dims:cat_dims + 2 * cont_dims])
    return cat, mu, sigma


if __name__ == "__main__":
    key = jax.random.PRNGKey(0)
    kx, kp = jax.random.split(key)

    B = 8
    CAT_DIMS = 10
    CONT_DIMS = 4

    # Input is the flattened 256*4*4 feature map expected by recog_fc2.
    x = jax.random.normal(kx, (B, IN_FEATURES), jnp.float32)
    params = init_params(kp, CAT_DIMS, CONT_DIMS)

    cat_out, cont_mu, cont_sigma = recognition_forward(x, params, CAT_DIMS, CONT_DIMS)
    jax.block_until_ready((cat_out, cont_mu, cont_sigma))

    assert cat_out.shape == (B, CAT_DIMS)
    assert cont_mu.shape == (B, CONT_DIMS)
    assert cont_sigma.shape == (B, CONT_DIMS)
    # Softmax rows sum to 1 (exact divide), sigma strictly positive.
    assert jnp.allclose(jnp.sum(cat_out, axis=-1), 1.0, atol=1e-3)
    assert bool(jnp.all(cont_sigma > 0))

    # Loose parity check vs. pure-JAX reference on bf16-rounded inputs
    # (kernel uses bf16 h / bf16 head matmul, so tolerance is a couple of percent).
    x_r = x.astype(jnp.bfloat16).astype(jnp.float32)
    ref_cat, ref_mu, ref_sigma = reference_forward(x_r, params, CAT_DIMS, CONT_DIMS)
    assert jnp.allclose(cat_out, ref_cat, atol=2e-2, rtol=2e-2)
    assert jnp.allclose(cont_mu, ref_mu, atol=2e-2, rtol=2e-2)
    assert jnp.allclose(cont_sigma, ref_sigma, atol=2e-2, rtol=2e-2)

    print("KERNEL_OK")
</pallas_src>

<mosaic_0001>
module attributes {stable_mosaic.version = 11 : i64} {
  func.func @_heads_kernel(%arg0: i32, %arg1: memref<1x128xf32, #tpu.memory_space<vmem>>, %arg2: memref<1x128xf32, #tpu.memory_space<vmem>>, %arg3: memref<128x128xbf16, #tpu.memory_space<vmem>>, %arg4: memref<1x128xf32, #tpu.memory_space<vmem>>, %arg5: memref<8x128xbf16, #tpu.memory_space<vmem>>, %arg6: memref<8x128xf32, #tpu.memory_space<vmem>>) attributes {dimension_semantics = [#tpu.dimension_semantics<parallel>], iteration_bounds = array<i64: 1>, scalar_prefetch = 0 : i64, scratch_operands = 0 : i64, tpu.core_type = #tpu.core_type<tc>, window_params = [{pipeline_mode = #tpu.pipeline_mode<synchronous>, transform_indices = @transform_0, window_bounds = array<i64: 1, 128>}, {pipeline_mode = #tpu.pipeline_mode<synchronous>, transform_indices = @transform_1, window_bounds = array<i64: 1, 128>}, {pipeline_mode = #tpu.pipeline_mode<synchronous>, transform_indices = @transform_2, window_bounds = array<i64: 128, 128>}, {pipeline_mode = #tpu.pipeline_mode<synchronous>, transform_indices = @transform_3, window_bounds = array<i64: 1, 128>}, {transform_indices = @transform_4, window_bounds = array<i64: 8, 128>}, {transform_indices = @transform_5, window_bounds = array<i64: 8, 128>}]} {
    %c0 = arith.constant 0 : index
    %c0_0 = arith.constant 0 : index
    %0 = vector.load %arg5[%c0, %c0_0] : memref<8x128xbf16, #tpu.memory_space<vmem>>, vector<8x128xbf16>
    %1 = arith.extf %0 : vector<8x128xbf16> to vector<8x128xf32>
    %c0_1 = arith.constant 0 : index
    %c0_2 = arith.constant 0 : index
    %2 = vector.load %arg1[%c0_1, %c0_2] : memref<1x128xf32, #tpu.memory_space<vmem>>, vector<1x128xf32>
    %3 = vector.broadcast %2 : vector<1x128xf32> to vector<8x128xf32>
    %4 = arith.mulf %1, %3 : vector<8x128xf32>
    %c0_3 = arith.constant 0 : index
    %c0_4 = arith.constant 0 : index
    %5 = vector.load %arg2[%c0_3, %c0_4] : memref<1x128xf32, #tpu.memory_space<vmem>>, vector<1x128xf32>
    %6 = vector.broadcast %5 : vector<1x128xf32> to vector<8x128xf32>
    %7 = arith.addf %4, %6 : vector<8x128xf32>
    %cst = arith.constant 0.000000e+00 : f32
    %8 = vector.broadcast %cst : f32 to vector<8x128xf32>
    %9 = arith.cmpf ogt, %7, %8 : vector<8x128xf32>
    %cst_5 = arith.constant 1.000000e-01 : f32
    %10 = vector.broadcast %cst_5 : f32 to vector<8x128xf32>
    %11 = arith.mulf %10, %7 : vector<8x128xf32>
    %12 = arith.select %9, %7, %11 : vector<8x128xi1>, vector<8x128xf32>
    %13 = arith.truncf %12 : vector<8x128xf32> to vector<8x128xbf16>
    %c0_6 = arith.constant 0 : index
    %c0_7 = arith.constant 0 : index
    %14 = vector.load %arg3[%c0_6, %c0_7] : memref<128x128xbf16, #tpu.memory_space<vmem>>, vector<128x128xbf16>
    %cst_8 = arith.constant dense<0.000000e+00> : vector<8x128xf32>
    %15 = tpu.matmul %13, %14, %cst_8 {dimension_numbers = #tpu.dot_dimension_numbers<[1], [0], [0], [1], [0, 0, 1, 1], [], []>} : vector<8x128xbf16>, vector<128x128xbf16>, vector<8x128xf32> -> vector<8x128xf32>
    %c0_9 = arith.constant 0 : index
    %c0_10 = arith.constant 0 : index
    %16 = vector.load %arg4[%c0_9, %c0_10] : memref<1x128xf32, #tpu.memory_space<vmem>>, vector<1x128xf32>
    %17 = vector.broadcast %16 : vector<1x128xf32> to vector<8x128xf32>
    %18 = arith.addf %15, %17 : vector<8x128xf32>
    %19 = tpu.iota {dimensions = array<i32: 1>} : vector<8x128xi32>
    %c10_i32 = arith.constant 10 : i32
    %20 = vector.broadcast %c10_i32 : i32 to vector<8x128xi32>
    %21 = arith.cmpi slt, %19, %20 : vector<8x128xi32>
    %c10_i32_11 = arith.constant 10 : i32
    %22 = vector.broadcast %c10_i32_11 : i32 to vector<8x128xi32>
    %23 = arith.cmpi sge, %19, %22 : vector<8x128xi32>
    %c14_i32 = arith.constant 14 : i32
    %24 = vector.broadcast %c14_i32 : i32 to vector<8x128xi32>
    %25 = arith.cmpi slt, %19, %24 : vector<8x128xi32>
    %26 = arith.andi %23, %25 : vector<8x128xi1>
    %c14_i32_12 = arith.constant 14 : i32
    %27 = vector.broadcast %c14_i32_12 : i32 to vector<8x128xi32>
    %28 = arith.cmpi sge, %19, %27 : vector<8x128xi32>
    %c18_i32 = arith.constant 18 : i32
    %29 = vector.broadcast %c18_i32 : i32 to vector<8x128xi32>
    %30 = arith.cmpi slt, %19, %29 : vector<8x128xi32>
    %31 = arith.andi %28, %30 : vector<8x128xi1>
    %cst_13 = arith.constant 0xFF800000 : f32
    %32 = vector.broadcast %cst_13 : f32 to vector<8x128xf32>
    %33 = arith.select %21, %18, %32 : vector<8x128xi1>, vector<8x128xf32>
    %cst_14 = arith.constant dense<0xFF800000> : vector<8xf32>
    %34 = vector.multi_reduction <maximumf>, %33, %cst_14 [1] : vector<8x128xf32> to vector<8xf32>
    %35 = vector.shape_cast %34 : vector<8xf32> to vector<8x1xf32>
    %cst_15 = arith.constant 0.000000e+00 : f32
    %36 = vector.shape_cast %35 : vector<8x1xf32> to vector<8x1xf32>
    %37 = vector.broadcast %36 : vector<8x1xf32> to vector<8x128xf32>
    %38 = vector.broadcast %cst_15 : f32 to vector<8x128xf32>
    %39 = arith.select %21, %37, %38 : vector<8x128xi1>, vector<8x128xf32>
    %40 = arith.subf %18, %39 : vector<8x128xf32>
    %41 = math.exp %40 : vector<8x128xf32>
    %cst_16 = arith.constant 0.000000e+00 : f32
    %42 = vector.broadcast %cst_16 : f32 to vector<8x128xf32>
    %43 = arith.select %21, %41, %42 : vector<8x128xi1>, vector<8x128xf32>
    %cst_17 = arith.constant dense<0.000000e+00> : vector<8xf32>
    %44 = vector.multi_reduction <add>, %43, %cst_17 [1] : vector<8x128xf32> to vector<8xf32>
    %45 = vector.shape_cast %44 : vector<8xf32> to vector<8x1xf32>
    %46 = vector.broadcast %45 : vector<8x1xf32> to vector<8x128xf32>
    %47 = arith.divf %41, %46 : vector<8x128xf32>
    %cst_18 = arith.constant 0.000000e+00 : f32
    %48 = vector.broadcast %cst_18 : f32 to vector<8x128xf32>
    %49 = arith.select %31, %41, %48 : vector<8x128xi1>, vector<8x128xf32>
    %50 = arith.select %26, %18, %49 : vector<8x128xi1>, vector<8x128xf32>
    %51 = arith.select %21, %47, %50 : vector<8x128xi1>, vector<8x128xf32>
    %c0_19 = arith.constant 0 : index
    %c0_20 = arith.constant 0 : index
    %52 = vector.load %arg6[%c0_19, %c0_20] : memref<8x128xf32, #tpu.memory_space<vmem>>, vector<8x128xf32>
    tpu.vector_store %arg6[%c0_19, %c0_20], %51 {strides = array<i32>} : memref<8x128xf32, #tpu.memory_space<vmem>>, vector<8x128xf32>,
    return
  }
  func.func @transform_0(%arg0: i32) -> (i32, i32) {
    %c0_i32 = arith.constant 0 : i32
    %c0_i32_0 = arith.constant 0 : i32
    %c0_i32_1 = arith.constant 0 : i32
    return %c0_i32, %c0_i32_0 : i32, i32
  }
  func.func @transform_1(%arg0: i32) -> (i32, i32) {
    %c0_i32 = arith.constant 0 : i32
    %c0_i32_0 = arith.constant 0 : i32
    %c0_i32_1 = arith.constant 0 : i32
    return %c0_i32, %c0_i32_0 : i32, i32
  }
  func.func @transform_2(%arg0: i32) -> (i32, i32) {
    %c0_i32 = arith.constant 0 : i32
    %c0_i32_0 = arith.constant 0 : i32
    %c0_i32_1 = arith.constant 0 : i32
    return %c0_i32, %c0_i32_0 : i32, i32
  }
  func.func @transform_3(%arg0: i32) -> (i32, i32) {
    %c0_i32 = arith.constant 0 : i32
    %c0_i32_0 = arith.constant 0 : i32
    %c0_i32_1 = arith.constant 0 : i32
    return %c0_i32, %c0_i32_0 : i32, i32
  }
  func.func @transform_4(%arg0: i32) -> (i32, i32) {
    %c0_i32 = arith.constant 0 : i32
    %c0_i32_0 = arith.constant 0 : i32
    return %arg0, %c0_i32 : i32, i32
  }
  func.func @transform_5(%arg0: i32) -> (i32, i32) {
    %c0_i32 = arith.constant 0 : i32
    %c0_i32_0 = arith.constant 0 : i32
    return %arg0, %c0_i32 : i32, i32
  }
}

module attributes {stable_mosaic.version = 11 : i64} {
  func.func @_linear_stats_kernel(%arg0: i32, %arg1: i32, %arg2: memref<8x4096xf32, #tpu.memory_space<vmem>>, %arg3: memref<4096x128xbf16, #tpu.memory_space<vmem>>, %arg4: memref<8x128xbf16, #tpu.memory_space<vmem>>, %arg5: memref<1x1x128xf32, #tpu.memory_space<vmem>>, %arg6: memref<1x1x128xf32, #tpu.memory_space<vmem>>) attributes {dimension_semantics = [#tpu.dimension_semantics<parallel>, #tpu.dimension_semantics<arbitrary>], iteration_bounds = array<i64: 1, 1>, scalar_prefetch = 0 : i64, scratch_operands = 0 : i64, tpu.core_type = #tpu.core_type<tc>, window_params = [{transform_indices = @transform_0, window_bounds = array<i64: 8, 4096>}, {pipeline_mode = #tpu.pipeline_mode<synchronous>, transform_indices = @transform_1, window_bounds = array<i64: 4096, 128>}, {transform_indices = @transform_2, window_bounds = array<i64: 8, 128>}, {transform_indices = @transform_3, window_bounds = array<i64: 1, 1, 128>}, {transform_indices = @transform_4, window_bounds = array<i64: 1, 1, 128>}]} {
    %c0_i32 = arith.constant 0 : i32
    %0 = arith.cmpi eq, %arg1, %c0_i32 : i32
    %1 = arith.extui %0 : i1 to i32
    %c0_i32_0 = arith.constant 0 : i32
    %2 = arith.cmpi ne, %1, %c0_i32_0 : i32
    scf.if %2 {
      %cst_23 = arith.constant 0.000000e+00 : f32
      %41 = vector.broadcast %cst_23 : f32 to vector<1x128xf32>
      %c0_24 = arith.constant 0 : index
      %c0_25 = arith.constant 0 : index
      %c0_26 = arith.constant 0 : index
      %42 = vector.load %arg5[%c0_24, %c0_25, %c0_26] : memref<1x1x128xf32, #tpu.memory_space<vmem>>, vector<1x1x128xf32>
      %43 = vector.shape_cast %42 : vector<1x1x128xf32> to vector<1x128xf32>
      %44 = vector.shape_cast %41 : vector<1x128xf32> to vector<1x1x128xf32>
      tpu.vector_store %arg5[%c0_24, %c0_25, %c0_26], %44 {strides = array<i32>} : memref<1x1x128xf32, #tpu.memory_space<vmem>>, vector<1x1x128xf32>,
      %cst_27 = arith.constant 0.000000e+00 : f32
      %45 = vector.broadcast %cst_27 : f32 to vector<1x128xf32>
      %c0_28 = arith.constant 0 : index
      %c0_29 = arith.constant 0 : index
      %c0_30 = arith.constant 0 : index
      %46 = vector.load %arg6[%c0_28, %c0_29, %c0_30] : memref<1x1x128xf32, #tpu.memory_space<vmem>>, vector<1x1x128xf32>
      %47 = vector.shape_cast %46 : vector<1x1x128xf32> to vector<1x128xf32>
      %48 = vector.shape_cast %45 : vector<1x128xf32> to vector<1x1x128xf32>
      tpu.vector_store %arg6[%c0_28, %c0_29, %c0_30], %48 {strides = array<i32>} : memref<1x1x128xf32, #tpu.memory_space<vmem>>, vector<1x1x128xf32>,
    } else {
    }
    %c0 = arith.constant 0 : index
    %c0_1 = arith.constant 0 : index
    %3 = vector.load %arg2[%c0, %c0_1] : memref<8x4096xf32, #tpu.memory_space<vmem>>, vector<8x4096xf32>
    %4 = arith.truncf %3 : vector<8x4096xf32> to vector<8x4096xbf16>
    %c0_2 = arith.constant 0 : index
    %c0_3 = arith.constant 0 : index
    %5 = vector.load %arg3[%c0_2, %c0_3] : memref<4096x128xbf16, #tpu.memory_space<vmem>>, vector<4096x128xbf16>
    %cst = arith.constant dense<0.000000e+00> : vector<8x128xf32>
    %6 = tpu.matmul %4, %5, %cst {dimension_numbers = #tpu.dot_dimension_numbers<[1], [0], [0], [1], [0, 0, 1, 1], [], []>} : vector<8x4096xbf16>, vector<4096x128xbf16>, vector<8x128xf32> -> vector<8x128xf32>
    %7 = arith.truncf %6 : vector<8x128xf32> to vector<8x128xbf16>
    %c0_4 = arith.constant 0 : index
    %c0_5 = arith.constant 0 : index
    %8 = vector.load %arg4[%c0_4, %c0_5] : memref<8x128xbf16, #tpu.memory_space<vmem>>, vector<8x128xbf16>
    tpu.vector_store %arg4[%c0_4, %c0_5], %7 {strides = array<i32>} : memref<8x128xbf16, #tpu.memory_space<vmem>>, vector<8x128xbf16>,
    %c1_i32 = arith.constant 1 : i32
    %9 = arith.muli %arg0, %c1_i32 : i32
    %10 = arith.addi %9, %arg1 : i32
    %c8_i32 = arith.constant 8 : i32
    %11 = arith.muli %10, %c8_i32 : i32
    %12 = tpu.iota {dimensions = array<i32: 0>} : vector<8x1xi32>
    %13 = vector.broadcast %11 : i32 to vector<8x1xi32>
    %14 = arith.addi %13, %12 : vector<8x1xi32>
    %c1_i32_6 = arith.constant 1 : i32
    %15 = arith.cmpi slt, %10, %c1_i32_6 : i32
    %c8_i32_7 = arith.constant 8 : i32
    %16 = vector.broadcast %c8_i32_7 : i32 to vector<8x1xi32>
    %17 = arith.cmpi slt, %14, %16 : vector<8x1xi32>
    %18 = vector.broadcast %15 : i1 to vector<8x1xi1>
    %19 = arith.andi %18, %17 : vector<8x1xi1>
    %cst_8 = arith.constant 0.000000e+00 : f32
    %20 = vector.shape_cast %19 : vector<8x1xi1> to vector<8x1xi1>
    %21 = vector.broadcast %20 : vector<8x1xi1> to vector<8x128xi1>
    %22 = vector.broadcast %cst_8 : f32 to vector<8x128xf32>
    %23 = arith.select %21, %6, %22 : vector<8x128xi1>, vector<8x128xf32>
    %c0_9 = arith.constant 0 : index
    %c0_10 = arith.constant 0 : index
    %c0_11 = arith.constant 0 : index
    %24 = vector.load %arg5[%c0_9, %c0_10, %c0_11] : memref<1x1x128xf32, #tpu.memory_space<vmem>>, vector<1x1x128xf32>
    %25 = vector.shape_cast %24 : vector<1x1x128xf32> to vector<1x128xf32>
    %cst_12 = arith.constant dense<0.000000e+00> : vector<128xf32>
    %26 = vector.multi_reduction <add>, %23, %cst_12 [0] : vector<8x128xf32> to vector<128xf32>
    %27 = vector.shape_cast %26 : vector<128xf32> to vector<1x128xf32>
    %28 = arith.addf %25, %27 : vector<1x128xf32>
    %c0_13 = arith.constant 0 : index
    %c0_14 = arith.constant 0 : index
    %c0_15 = arith.constant 0 : index
    %29 = vector.load %arg5[%c0_13, %c0_14, %c0_15] : memref<1x1x128xf32, #tpu.memory_space<vmem>>, vector<1x1x128xf32>
    %30 = vector.shape_cast %29 : vector<1x1x128xf32> to vector<1x128xf32>
    %31 = vector.shape_cast %28 : vector<1x128xf32> to vector<1x1x128xf32>
    tpu.vector_store %arg5[%c0_13, %c0_14, %c0_15], %31 {strides = array<i32>} : memref<1x1x128xf32, #tpu.memory_space<vmem>>, vector<1x1x128xf32>,
    %c0_16 = arith.constant 0 : index
    %c0_17 = arith.constant 0 : index
    %c0_18 = arith.constant 0 : index
    %32 = vector.load %arg6[%c0_16, %c0_17, %c0_18] : memref<1x1x128xf32, #tpu.memory_space<vmem>>, vector<1x1x128xf32>
    %33 = vector.shape_cast %32 : vector<1x1x128xf32> to vector<1x128xf32>
    %34 = arith.mulf %23, %23 : vector<8x128xf32>
    %cst_19 = arith.constant dense<0.000000e+00> : vector<128xf32>
    %35 = vector.multi_reduction <add>, %34, %cst_19 [0] : vector<8x128xf32> to vector<128xf32>
    %36 = vector.shape_cast %35 : vector<128xf32> to vector<1x128xf32>
    %37 = arith.addf %33, %36 : vector<1x128xf32>
    %c0_20 = arith.constant 0 : index
    %c0_21 = arith.constant 0 : index
    %c0_22 = arith.constant 0 : index
    %38 = vector.load %arg6[%c0_20, %c0_21, %c0_22] : memref<1x1x128xf32, #tpu.memory_space<vmem>>, vector<1x1x128xf32>
    %39 = vector.shape_cast %38 : vector<1x1x128xf32> to vector<1x128xf32>
    %40 = vector.shape_cast %37 : vector<1x128xf32> to vector<1x1x128xf32>
    tpu.vector_store %arg6[%c0_20, %c0_21, %c0_22], %40 {strides = array<i32>} : memref<1x1x128xf32, #tpu.memory_space<vmem>>, vector<1x1x128xf32>,
    return
  }
  func.func @transform_0(%arg0: i32, %arg1: i32) -> (i32, i32) {
    %c1_i32 = arith.constant 1 : i32
    %0 = arith.muli %arg0, %c1_i32 : i32
    %1 = arith.addi %0, %arg1 : i32
    %c0_i32 = arith.constant 0 : i32
    %2 = arith.minsi %1, %c0_i32 : i32
    %c0_i32_0 = arith.constant 0 : i32
    %c0_i32_1 = arith.constant 0 : i32
    return %2, %c0_i32_0 : i32, i32
  }
  func.func @transform_1(%arg0: i32, %arg1: i32) -> (i32, i32) {
    %c0_i32 = arith.constant 0 : i32
    %c0_i32_0 = arith.constant 0 : i32
    %c0_i32_1 = arith.constant 0 : i32
    return %c0_i32, %c0_i32_0 : i32, i32
  }
  func.func @transform_2(%arg0: i32, %arg1: i32) -> (i32, i32) {
    %c1_i32 = arith.constant 1 : i32
    %0 = arith.muli %arg0, %c1_i32 : i32
    %1 = arith.addi %0, %arg1 : i32
    %c0_i32 = arith.constant 0 : i32
    %2 = arith.minsi %1, %c0_i32 : i32
    %c0_i32_0 = arith.constant 0 : i32
    %c0_i32_1 = arith.constant 0 : i32
    return %2, %c0_i32_0 : i32, i32
  }
  func.func @transform_3(%arg0: i32, %arg1: i32) -> (i32, i32, i32) {
    %c0_i32 = arith.constant 0 : i32
    %c0_i32_0 = arith.constant 0 : i32
    %c0_i32_1 = arith.constant 0 : i32
    return %arg0, %c0_i32, %c0_i32_0 : i32, i32, i32
  }
  func.func @transform_4(%arg0: i32, %arg1: i32) -> (i32, i32, i32) {
    %c0_i32 = arith.constant 0 : i32
    %c0_i32_0 = arith.constant 0 : i32
    %c0_i32_1 = arith.constant 0 : i32
    return %arg0, %c0_i32, %c0_i32_0 : i32, i32, i32
  }
}

</mosaic_0001>

<llo_original>
// kernel: recognition_forward.3
$region0: #{recognition_forward.3}
  #allocation0 [shape = 'u32[]', space=smem, size = 0x4, offset = 0x4, fixed_abs, tag = 'smem constant byte address 0x4 - core index']
  #allocation1 [shape = 'u32[72,128]{1,0:T(1,128)}', space=vmem, size = 0x9000, scoped, tag = 'internal scratch']
  %s0 = inlined_call_operand.vmem [shape: f32[1,128], index: 0, kind: input, shape index: {}]
  %s1 = inlined_call_operand.vmem [shape: f32[1,128], index: 1, kind: input, shape index: {}]
  %s2 = inlined_call_operand.hbm [shape: bf16[128,128], index: 2, kind: input, shape index: {}]
  %s3 = inlined_call_operand.vmem [shape: f32[1,128], index: 3, kind: input, shape index: {}]
  %s4 = inlined_call_operand.vmem [shape: bf16[8,128], index: 4, kind: input, shape index: {}]
  %s5 = inlined_call_operand.vmem [shape: f32[8,128], index: 5, kind: output, shape index: {}]
  %s6 = sld [smem:[#allocation0]]
  $region34: #{recognition_forward.3} parent=0
    _
  %s8 = ssub.s32 1, %s6
  %s9 = scalar_select 0, %s8, %s6
  $region1: #{recognition_forward.3} parent=0
    #allocation2 [shape = 'u8[32768]{0}', space=vmem, size = 0x8000, scoped, tag = 'input window, operand 2, single buffered']
    #allocation3 [shape = 's32[1]{0}', space=sflag, size = 0x4, scoped, tag = 'scoped memory for recognition_forward.3']
    %10 = vsyncpa [#allocation3], 0
    // Predicated region
    $region2: #{recognition_forward.3} parent=1 // pred_check
      _
    $region3: #{recognition_forward.3} parent=1 // pred_check_branch
      %12 = sbr.rel (0) target = $region5
    $region4: #{recognition_forward.3} parent=1 // pred_region
      _
    $region5: #{recognition_forward.3} parent=1 // pred_fallthru
      _
    // Predicated region
    $region6: #{recognition_forward.3} parent=1 // pred_check
      _
    $region7: #{recognition_forward.3} parent=1 // pred_check_branch
      %14 = sbr.rel (0) target = $region9
    $region8: #{recognition_forward.3} parent=1 // pred_region
      _
    $region9: #{recognition_forward.3} parent=1 // pred_fallthru
      _
    // Predicated region
    $region10: #{recognition_forward.3} parent=1 // pred_check
      _
    $region11: #{recognition_forward.3} parent=1 // pred_check_branch
      %16 = sbr.rel (0) target = $region13
    $region12: #{recognition_forward.3} parent=1 // pred_region
      %18 = vsyncadd [#allocation3], 0
      %s19 = sshll.u32 %s2, 4
      %s20 = int_to_ptr.hbm [resolvable:$true] %s19
      %s21 = sshll.u32 [#allocation2], 4
      %s22 = int_to_ptr.vmem [resolvable:$true] %s21
      %27 = dma.hbm_to_vmem [thread:$0]  %s20, 1024, %s22, [#allocation3], 64, 64, 4
    $region13: #{recognition_forward.3} parent=1 // pred_fallthru
      _
    // Predicated region
    $region14: #{recognition_forward.3} parent=1 // pred_check
      _
    $region15: #{recognition_forward.3} parent=1 // pred_check_branch
      %29 = sbr.rel (0) target = $region17
    $region16: #{recognition_forward.3} parent=1 // pred_region
      _
    $region17: #{recognition_forward.3} parent=1 // pred_fallthru
      _
    // Predicated region
    $region18: #{recognition_forward.3} parent=1 // pred_check
      _
    $region19: #{recognition_forward.3} parent=1 // pred_check_branch
      %31 = sbr.rel (0) target = $region21
    $region20: #{recognition_forward.3} parent=1 // pred_region
      _
    $region21: #{recognition_forward.3} parent=1 // pred_fallthru
      _
    // Predicated region
    $region22: #{recognition_forward.3} parent=1 // pred_check
      _
    $region23: #{recognition_forward.3} parent=1 // pred_check_branch
      %33 = sbr.rel (0) target = $region25
    $region24: #{recognition_forward.3} parent=1 // pred_region
      %35 = dma.done [#allocation3], 1024
    $region25: #{recognition_forward.3} parent=1 // pred_fallthru
      _
    %v36 = vld [vmem:[%s4] sm:$0xf]
    %v37 = vunpack.c.l.bf16 %v36
    %v38 = vld [vmem:[%s0] sm:$0x1]
    %v40 = vperm.slane %v38, 0
    %v42 = vmul.f32 %v37, %v40
    %v43 = vld [vmem:[%s1] sm:$0x1]
    %v45 = vperm.slane %v43, 0
    %v47 = vadd.f32 %v42, %v45
    %vm48 = vcmp.gt.f32.partialorder %v47, 0.0
    %v49 = vmul.f32 %v47, 0.1
    %v50 = vsel %vm48, %v47, %v49
    %v51 = vpack.c.bf16 %v50, %v50
    %v52 = vld [vmem:[#allocation2] sm:$0xf]
    %v53 = vld [vmem:[#allocation2 + $0x4] sm:$0xf]
    %v54 = vld [vmem:[#allocation2 + $0x8] sm:$0xf]
    %v55 = vld [vmem:[#allocation2 + $0xc] sm:$0xf]
    %v56 = vld [vmem:[#allocation2 + $0x10] sm:$0xf]
    %v57 = vld [vmem:[#allocation2 + $0x14] sm:$0xf]
    %v58 = vld [vmem:[#allocation2 + $0x18] sm:$0xf]
    %v59 = vld [vmem:[#allocation2 + $0x1c] sm:$0xf]
    %v60 = vld [vmem:[#allocation2 + $0x20] sm:$0xf]
    %v61 = vld [vmem:[#allocation2 + $0x24] sm:$0xf]
    %v62 = vld [vmem:[#allocation2 + $0x28] sm:$0xf]
    %v63 = vld [vmem:[#allocation2 + $0x2c] sm:$0xf]
    %v64 = vld [vmem:[#allocation2 + $0x30] sm:$0xf]
    %v65 = vld [vmem:[#allocation2 + $0x34] sm:$0xf]
    %v66 = vld [vmem:[#allocation2 + $0x38] sm:$0xf]
    %v67 = vld [vmem:[#allocation2 + $0x3c] sm:$0xf]
    %v68 = vld [vmem:[%s3] sm:$0x1]
    %v70 = vperm.slane %v68, 0
    %v88 = vunpack.c.l.b16 %v52
    %v89 = vunpack.c.l.b16 %v53
    %v90 = vunpack.c.l.b16 %v54
    %v91 = vunpack.c.l.b16 %v55
    %v92 = vunpack.c.l.b16 %v56
    %v93 = vunpack.c.l.b16 %v57
    %v94 = vunpack.c.l.b16 %v58
    %v95 = vunpack.c.l.b16 %v59
    %v96 = vunpack.c.l.b16 %v60
    %v97 = vunpack.c.l.b16 %v61
    %v98 = vunpack.c.l.b16 %v62
    %v99 = vunpack.c.l.b16 %v63
    %v100 = vunpack.c.l.b16 %v64
    %v101 = vunpack.c.l.b16 %v65
    %v102 = vunpack.c.l.b16 %v66
    %v103 = vunpack.c.l.b16 %v67
    %v104 = vpack.c.b16 %v89, %v88
    %v105 = vpack.c.b16 %v91, %v90
    %v106 = vpack.c.b16 %v93, %v92
    %v107 = vpack.c.b16 %v95, %v94
    %v108 = vpack.c.b16 %v97, %v96
    %v109 = vpack.c.b16 %v99, %v98
    %v110 = vpack.c.b16 %v101, %v100
    %v111 = vpack.c.b16 %v103, %v102
    %120 = vmatpush.bf16.msra.mxu0 %v111
    %121 = vmatpush.bf16.msra.mxu0 %v110
    %122 = vmatpush.bf16.msra.mxu0 %v109
    %123 = vmatpush.bf16.msra.mxu0 %v108
    %124 = vmatpush.bf16.msra.mxu0 %v107
    %125 = vmatpush.bf16.msra.mxu0 %v106
    %126 = vmatpush.bf16.msra.mxu0 %v105
    %127 = vmatpush.bf16.msra.mxu0 %v104
    %128 = vmatmul.bf16.gmra.mxu0 %v51
    %v129 = vpop.f32.mrf.mxu0
    %v130 = vadd.f32 %v70, %v129
    %v131 = vpop.f32.mrf.mxu0
    %132 = vdwg.mxu0
    %v133 = vlaneseq
    %v134 = vand.u32 %v133, 127
    %vm135 = vcmp.lt.s32.totalorder %v134, 10
    %vm136 = vcmp.ge.s32.totalorder %v134, 10
    %vm137 = vcmp.lt.s32.totalorder %v134, 14
    %vm138 = vmand %vm136, %vm137
    %vm139 = vcmp.ge.s32.totalorder %v134, 14
    %vm140 = vcmp.lt.s32.totalorder %v134, 18
    %vm141 = vmand %vm139, %vm140
    %v142 = vsel %vm135, %v130, -inf
    %143 = vmax.xlane.f32.xlu0 %v142
    %v144 = vpop.xlane.xlu0 %143
    %v145 = vsel %vm135, %v144, 0.0
    %v146 = vsub.f32 %v130, %v145
    %v147 = vmul.f32 %v146, 1.442695
    %v148 = vpow.pop %v147
    %v149 = vsel %vm135, %v148, 0.0
    %150 = vadd.xlane.f32.xlu0 %v149
    %v151 = vpop.xlane.xlu0 %150
    %v152 = vrcp.pop %v151
    %v153 = vmul.f32 %v151, %v152
    %v154 = vsub.f32 1.0, %v153
    %v155 = vmul.f32 %v152, %v154
    %v156 = vadd.f32 %v152, %v155
    %vm157 = vweird.f32 %v151
    %vm158 = vweird.f32 %v152
    %vm159 = vmor %vm157, %vm158
    %v160 = vsel %vm159, %v152, %v156
    %v161 = vand.u32 2147483647, %v151
    %vm162 = vcmp.eq.f32.partialorder %v161, 8.507059e+37
    %v163 = vand.u32 %v151, 2147483648
    %v164 = vor.u32 1.1754944e-38, %v163
    %v165 = vsel %vm162, %v164, %v160
    %v166 = vmul.f32 %v148, %v165
    %v167 = vsel %vm141, %v148, 0.0
    %v168 = vsel %vm138, %v130, %v167
    %v169 = vsel %vm135, %v166, %v168
    %170 = vst [vmem:[%s5] sm:$0xff] %v169
    // Predicated region
    $region26: #{recognition_forward.3} parent=1 // pred_check
      _
    $region27: #{recognition_forward.3} parent=1 // pred_check_branch
      %172 = sbr.rel (0) target = $region29
    $region28: #{recognition_forward.3} parent=1 // pred_region
      _
    $region29: #{recognition_forward.3} parent=1 // pred_fallthru
      _
    // Predicated region
    $region30: #{recognition_forward.3} parent=1 // pred_check
      _
    $region31: #{recognition_forward.3} parent=1 // pred_check_branch
      %174 = sbr.rel (0) target = $region33
    $region32: #{recognition_forward.3} parent=1 // pred_region
      _
    $region33: #{recognition_forward.3} parent=1 // pred_fallthru
      _
    %175 = vsyncpa [#allocation3], 1

// kernel: recognition_forward.2
$region0: #{recognition_forward.2}
  #allocation0 [shape = 'u32[]', space=smem, size = 0x4, offset = 0x4, fixed_abs, tag = 'smem constant byte address 0x4 - core index']
  #allocation1 [shape = 'u32[72,128]{1,0:T(1,128)}', space=vmem, size = 0x9000, scoped, tag = 'internal scratch']
  %s0 = inlined_call_operand.hbm [shape: f32[8,4096], index: 0, kind: input, shape index: {}]
  %s1 = inlined_call_operand.hbm [shape: bf16[4096,128], index: 1, kind: input, shape index: {}]
  %s2 = inlined_call_operand.vmem [shape: bf16[8,128], index: 2, kind: output, shape index: {0}]
  %s3 = inlined_call_operand.vmem [shape: f32[1,1,128], index: 3, kind: output, shape index: {1}]
  %s4 = inlined_call_operand.vmem [shape: f32[1,1,128], index: 4, kind: output, shape index: {2}]
  %5 = xla_tuple %s2, %s3, %s4
  %s6 = sld [smem:[#allocation0]]
  $region46: #{recognition_forward.2} parent=0
    _
  %s8 = ssub.s32 1, %s6
  %s9 = scalar_select 0, %s8, %s6
  $region1: #{recognition_forward.2} parent=0
    #allocation2 [shape = 'u8[131072]{0}', space=vmem, size = 0x20000, scoped, tag = 'input window, operand 0, single buffered']
    #allocation3 [shape = 's32[1]{0}', space=sflag, size = 0x4, scoped, tag = 'scoped memory for recognition_forward.2']
    #allocation4 [shape = 'u8[1048576]{0}', space=vmem, size = 0x100000, scoped, tag = 'input window, operand 1, single buffered']
    #allocation5 [shape = 's32[1]{0}', space=sflag, size = 0x4, scoped, tag = 'scoped memory for recognition_forward.2']
    %10 = vsyncpa [#allocation3], 0
    %11 = vsyncpa [#allocation5], 0
    // Predicated region
    $region2: #{recognition_forward.2} parent=1 // pred_check
      _
    $region3: #{recognition_forward.2} parent=1 // pred_check_branch
      %13 = sbr.rel (0) target = $region5
    $region4: #{recognition_forward.2} parent=1 // pred_region
      %s14 = sadd.s32 0, 0
      %p15 = scmp.lt.s32.totalorder %s14, 0
      %s16 = scalar_select %p15, %s14, 0
      %18 = vsyncadd [#allocation3], 0
      %s19 = smul.addr %s16, 32
      %s20 = smul.addr %s19, 8
      %s21 = scalar_lea.hbm %s0, %s20
      %s23 = sshll.u32 %s21, 4
      %s24 = int_to_ptr.hbm [resolvable:$true] %s23
      %s25 = sshll.u32 [#allocation2], 4
      %s26 = int_to_ptr.vmem [resolvable:$true] %s25
      %28 = dma.hbm_to_vmem [thread:$0]  %s24, 4096, %s26, [#allocation3]
    $region5: #{recognition_forward.2} parent=1 // pred_fallthru
      _
    // Predicated region
    $region6: #{recognition_forward.2} parent=1 // pred_check
      _
    $region7: #{recognition_forward.2} parent=1 // pred_check_branch
      %30 = sbr.rel (0) target = $region9
    $region8: #{recognition_forward.2} parent=1 // pred_region
      %32 = vsyncadd [#allocation5], 0
      %s33 = sshll.u32 %s1, 4
      %s34 = int_to_ptr.hbm [resolvable:$true] %s33
      %s35 = sshll.u32 [#allocation4], 4
      %s36 = int_to_ptr.vmem [resolvable:$true] %s35
      %41 = dma.hbm_to_vmem [thread:$0]  %s34, 32768, %s36, [#allocation5], 64, 64, 4
    $region9: #{recognition_forward.2} parent=1 // pred_fallthru
      _
    // Predicated region
    $region10: #{recognition_forward.2} parent=1 // pred_check
      _
    $region11: #{recognition_forward.2} parent=1 // pred_check_branch
      %43 = sbr.rel (0) target = $region13
    $region12: #{recognition_forward.2} parent=1 // pred_region
      %45 = dma.done [#allocation3], 4096
    $region13: #{recognition_forward.2} parent=1 // pred_fallthru
      _
    // Predicated region
    $region14: #{recognition_forward.2} parent=1 // pred_check
      _
    $region15: #{recognition_forward.2} parent=1 // pred_check_branch
      %47 = sbr.rel (0) target = $region17
    $region16: #{recognition_forward.2} parent=1 // pred_region
      %49 = dma.done [#allocation5], 32768
    $region17: #{recognition_forward.2} parent=1 // pred_fallthru
      _
    %s50 = sadd.s32 0, 0
    %p51 = scmp.lt.s32.totalorder %s50, 0
    %s52 = scalar_select %p51, %s50, 0
    %p53 = scmp.lt.s32.totalorder %s52, 0
    %s54 = scalar_select %p53, %s52, 0
    %s55 = smul.addr %s54, 4
    %s56 = scalar_lea.vmem %s2, %s55
    %s57 = sadd.s32 0, 0
    %p58 = scmp.lt.s32.totalorder %s57, 0
    %s59 = scalar_select %p58, %s57, 0
    %s60 = sadd.s32 0, 0
    %p61 = scmp.lt.s32.totalorder %s60, 0
    %s62 = scalar_select %p61, %s60, 0
    %p63 = scmp.lt.s32.totalorder %s62, 0
    %s64 = scalar_select %p63, %s62, 0
    %s65 = smul.addr %s64, 4
    %s66 = scalar_lea.vmem %s2, %s65
    %s67 = sadd.s32 0, 0
    %p68 = scmp.lt.s32.totalorder %s67, 0
    %s69 = scalar_select %p68, %s67, 0
    %p70 = scmp.eq.s32.totalorder 0, 0
    // Predicated region
    $region18: #{recognition_forward.2} parent=1 // pred_check
      %p71 = pneg %p70
    $region19: #{recognition_forward.2} parent=1 // pred_check_branch
      %73 = sbr.rel (%p71) target = $region21
    $region20: #{recognition_forward.2} parent=1 // pred_region
      %74 = vst [vmem:[%s3] sm:$0x1] 0.0
      %75 = vst [vmem:[%s4] sm:$0x1] 0.0
    $region21: #{recognition_forward.2} parent=1 // pred_fallthru
      _
    %v76 = vld [vmem:[#allocation2] sm:$0xff]
    %v77 = vld [vmem:[#allocation2 + $0x8] sm:$0xff]
    %v78 = vld [vmem:[#allocation2 + $0x10] sm:$0xff]
    %v79 = vld [vmem:[#allocation2 + $0x18] sm:$0xff]
    %v80 = vld [vmem:[#allocation2 + $0x20] sm:$0xff]
    %v81 = vld [vmem:[#allocation2 + $0x28] sm:$0xff]
    %v82 = vld [vmem:[#allocation2 + $0x30] sm:$0xff]
    %v83 = vld [vmem:[#allocation2 + $0x38] sm:$0xff]
    %v84 = vld [vmem:[#allocation2 + $0x40] sm:$0xff]
    %v85 = vld [vmem:[#allocation2 + $0x48] sm:$0xff]
    %v86 = vld [vmem:[#allocation2 + $0x50] sm:$0xff]
    %v87 = vld [vmem:[#allocation2 + $0x58] sm:$0xff]
    %v88 = vld [vmem:[#allocation2 + $0x60] sm:$0xff]
    %v89 = vld [vmem:[#allocation2 + $0x68] sm:$0xff]
    %v90 = vld [vmem:[#allocation2 + $0x70] sm:$0xff]
    %v91 = vld [vmem:[#allocation2 + $0x78] sm:$0xff]
    %v92 = vld [vmem:[#allocation2 + $0x80] sm:$0xff]
    %v93 = vld [vmem:[#allocation2 + $0x88] sm:$0xff]
    %v94 = vld [vmem:[#allocation2 + $0x90] sm:$0xff]
    %v95 = vld [vmem:[#allocation2 + $0x98] sm:$0xff]
    %v96 = vld [vmem:[#allocation2 + $0xa0] sm:$0xff]
    %v97 = vld [vmem:[#allocation2 + $0xa8] sm:$0xff]
    %v98 = vld [vmem:[#allocation2 + $0xb0] sm:$0xff]
    %v99 = vld [vmem:[#allocation2 + $0xb8] sm:$0xff]
    %v100 = vld [vmem:[#allocation2 + $0xc0] sm:$0xff]
    %v101 = vld [vmem:[#allocation2 + $0xc8] sm:$0xff]
    %v102 = vld [vmem:[#allocation2 + $0xd0] sm:$0xff]
    %v103 = vld [vmem:[#allocation2 + $0xd8] sm:$0xff]
    %v104 = vld [vmem:[#allocation2 + $0xe0] sm:$0xff]
    %v105 = vld [vmem:[#allocation2 + $0xe8] sm:$0xff]
    %v106 = vld [vmem:[#allocation2 + $0xf0] sm:$0xff]
    %v107 = vld [vmem:[#allocation2 + $0xf8] sm:$0xff]
    %v108 = vpack.c.bf16 %v76, %v76
    %v109 = vpack.c.bf16 %v77, %v77
    %v110 = vpack.c.bf16 %v78, %v78
    %v111 = vpack.c.bf16 %v79, %v79
    %v112 = vpack.c.bf16 %v80, %v80
    %v113 = vpack.c.bf16 %v81, %v81
    %v114 = vpack.c.bf16 %v82, %v82
    %v115 = vpack.c.bf16 %v83, %v83
    %v116 = vpack.c.bf16 %v84, %v84
    %v117 = vpack.c.bf16 %v85, %v85
    %v118 = vpack.c.bf16 %v86, %v86
    %v119 = vpack.c.bf16 %v87, %v87
    %v120 = vpack.c.bf16 %v88, %v88
    %v121 = vpack.c.bf16 %v89, %v89
    %v122 = vpack.c.bf16 %v90, %v90
    %v123 = vpack.c.bf16 %v91, %v91
    %v124 = vpack.c.bf16 %v92, %v92
    %v125 = vpack.c.bf16 %v93, %v93
    %v126 = vpack.c.bf16 %v94, %v94
    %v127 = vpack.c.bf16 %v95, %v95
    %v128 = vpack.c.bf16 %v96, %v96
    %v129 = vpack.c.bf16 %v97, %v97
    %v130 = vpack.c.bf16 %v98, %v98
    %v131 = vpack.c.bf16 %v99, %v99
    %v132 = vpack.c.bf16 %v100, %v100
    %v133 = vpack.c.bf16 %v101, %v101
    %v134 = vpack.c.bf16 %v102, %v102
    %v135 = vpack.c.bf16 %v103, %v103
    %v136 = vpack.c.bf16 %v104, %v104
    %v137 = vpack.c.bf16 %v105, %v105
    %v138 = vpack.c.bf16 %v106, %v106
    %v139 = vpack.c.bf16 %v107, %v107
    %v140 = vld [vmem:[#allocation4] sm:$0xf]
    %v141 = vld [vmem:[#allocation4 + $0x4] sm:$0xf]
    %v142 = vld [vmem:[#allocation4 + $0x8] sm:$0xf]
    %v143 = vld [vmem:[#allocation4 + $0xc] sm:$0xf]
    %v144 = vld [vmem:[#allocation4 + $0x10] sm:$0xf]
    %v145 = vld [vmem:[#allocation4 + $0x14] sm:$0xf]
    %v146 = vld [vmem:[#allocation4 + $0x18] sm:$0xf]
    %v147 = vld [vmem:[#allocation4 + $0x1c] sm:$0xf]
    %v148 = vld [vmem:[#allocation4 + $0x20] sm:$0xf]
    %v149 = vld [vmem:[#allocation4 + $0x24] sm:$0xf]
    %v150 = vld [vmem:[#allocation4 + $0x28] sm:$0xf]
    %v151 = vld [vmem:[#allocation4 + $0x2c] sm:$0xf]
    %v152 = vld [vmem:[#allocation4 + $0x30] sm:$0xf]
    %v153 = vld [vmem:[#allocation4 + $0x34] sm:$0xf]
    %v154 = vld [vmem:[#allocation4 + $0x38] sm:$0xf]
    %v155 = vld [vmem:[#allocation4 + $0x3c] sm:$0xf]
    %v156 = vld [vmem:[#allocation4 + $0x40] sm:$0xf]
    %v157 = vld [vmem:[#allocation4 + $0x44] sm:$0xf]
    %v158 = vld [vmem:[#allocation4 + $0x48] sm:$0xf]
    %v159 = vld [vmem:[#allocation4 + $0x4c] sm:$0xf]
    %v160 = vld [vmem:[#allocation4 + $0x50] sm:$0xf]
    %v161 = vld [vmem:[#allocation4 + $0x54] sm:$0xf]
    %v162 = vld [vmem:[#allocation4 + $0x58] sm:$0xf]
    %v163 = vld [vmem:[#allocation4 + $0x5c] sm:$0xf]
    %v164 = vld [vmem:[#allocation4 + $0x60] sm:$0xf]
    %v165 = vld [vmem:[#allocation4 + $0x64] sm:$0xf]
    %v166 = vld [vmem:[#allocation4 + $0x68] sm:$0xf]
    %v167 = vld [vmem:[#allocation4 + $0x6c] sm:$0xf]
    %v168 = vld [vmem:[#allocation4 + $0x70] sm:$0xf]
    %v169 = vld [vmem:[#allocation4 + $0x74] sm:$0xf]
    %v170 = vld [vmem:[#allocation4 + $0x78] sm:$0xf]
    %v171 = vld [vmem:[#allocation4 + $0x7c] sm:$0xf]
    %v172 = vld [vmem:[#allocation4 + $0x80] sm:$0xf]
    %v173 = vld [vmem:[#allocation4 + $0x84] sm:$0xf]
    %v174 = vld [vmem:[#allocation4 + $0x88] sm:$0xf]
    %v175 = vld [vmem:[#allocation4 + $0x8c] sm:$0xf]
    %v176 = vld [vmem:[#allocation4 + $0x90] sm:$0xf]
    %v177 = vld [vmem:[#allocation4 + $0x94] sm:$0xf]
    %v178 = vld [vmem:[#allocation4 + $0x98] sm:$0xf]
    %v179 = vld [vmem:[#allocation4 + $0x9c] sm:$0xf]
    %v180 = vld [vmem:[#allocation4 + $0xa0] sm:$0xf]
    %v181 = vld [vmem:[#allocation4 + $0xa4] sm:$0xf]
    %v182 = vld [vmem:[#allocation4 + $0xa8] sm:$0xf]
    %v183 = vld [vmem:[#allocation4 + $0xac] sm:$0xf]
    %v184 = vld [vmem:[#allocation4 + $0xb0] sm:$0xf]
    %v185 = vld [vmem:[#allocation4 + $0xb4] sm:$0xf]
    %v186 = vld [vmem:[#allocation4 + $0xb8] sm:$0xf]
    %v187 = vld [vmem:[#allocation4 + $0xbc] sm:$0xf]
    %v188 = vld [vmem:[#allocation4 + $0xc0] sm:$0xf]
    %v189 = vld [vmem:[#allocation4 + $0xc4] sm:$0xf]
    %v190 = vld [vmem:[#allocation4 + $0xc8] sm:$0xf]
    %v191 = vld [vmem:[#allocation4 + $0xcc] sm:$0xf]
    %v192 = vld [vmem:[#allocation4 + $0xd0] sm:$0xf]
    %v193 = vld [vmem:[#allocation4 + $0xd4] sm:$0xf]
    %v194 = vld [vmem:[#allocation4 + $0xd8] sm:$0xf]
    %v195 = vld [vmem:[#allocation4 + $0xdc] sm:$0xf]
    %v196 = vld [vmem:[#allocation4 + $0xe0] sm:$0xf]
    %v197 = vld [vmem:[#allocation4 + $0xe4] sm:$0xf]
    %v198 = vld [vmem:[#allocation4 + $0xe8] sm:$0xf]
    %v199 = vld [vmem:[#allocation4 + $0xec] sm:$0xf]
    %v200 = vld [vmem:[#allocation4 + $0xf0] sm:$0xf]
    %v201 = vld [vmem:[#allocation4 + $0xf4] sm:$0xf]
    %v202 = vld [vmem:[#allocation4 + $0xf8] sm:$0xf]
    %v203 = vld [vmem:[#allocation4 + $0xfc] sm:$0xf]
    %v204 = vld [vmem:[#allocation4 + $0x100] sm:$0xf]
    %v205 = vld [vmem:[#allocation4 + $0x104] sm:$0xf]
    %v206 = vld [vmem:[#allocation4 + $0x108] sm:$0xf]
    %v207 = vld [vmem:[#allocation4 + $0x10c] sm:$0xf]
    %v208 = vld [vmem:[#allocation4 + $0x110] sm:$0xf]
    %v209 = vld [vmem:[#allocation4 + $0x114] sm:$0xf]
    %v210 = vld [vmem:[#allocation4 + $0x118] sm:$0xf]
    %v211 = vld [vmem:[#allocation4 + $0x11c] sm:$0xf]
    %v212 = vld [vmem:[#allocation4 + $0x120] sm:$0xf]
    %v213 = vld [vmem:[#allocation4 + $0x124] sm:$0xf]
    %v214 = vld [vmem:[#allocation4 + $0x128] sm:$0xf]
    %v215 = vld [vmem:[#allocation4 + $0x12c] sm:$0xf]
    %v216 = vld [vmem:[#allocation4 + $0x130] sm:$0xf]
    %v217 = vld [vmem:[#allocation4 + $0x134] sm:$0xf]
    %v218 = vld [vmem:[#allocation4 + $0x138] sm:$0xf]
    %v219 = vld [vmem:[#allocation4 + $0x13c] sm:$0xf]
    %v220 = vld [vmem:[#allocation4 + $0x140] sm:$0xf]
    %v221 = vld [vmem:[#allocation4 + $0x144] sm:$0xf]
    %v222 = vld [vmem:[#allocation4 + $0x148] sm:$0xf]
    %v223 = vld [vmem:[#allocation4 + $0x14c] sm:$0xf]
    %v224 = vld [vmem:[#allocation4 + $0x150] sm:$0xf]
    %v225 = vld [vmem:[#allocation4 + $0x154] sm:$0xf]
    %v226 = vld [vmem:[#allocation4 + $0x158] sm:$0xf]
    %v227 = vld [vmem:[#allocation4 + $0x15c] sm:$0xf]
    %v228 = vld [vmem:[#allocation4 + $0x160] sm:$0xf]
    %v229 = vld [vmem:[#allocation4 + $0x164] sm:$0xf]
    %v230 = vld [vmem:[#allocation4 + $0x168] sm:$0xf]
    %v231 = vld [vmem:[#allocation4 + $0x16c] sm:$0xf]
    %v232 = vld [vmem:[#allocation4 + $0x170] sm:$0xf]
    %v233 = vld [vmem:[#allocation4 + $0x174] sm:$0xf]
    %v234 = vld [vmem:[#allocation4 + $0x178] sm:$0xf]
    %v235 = vld [vmem:[#allocation4 + $0x17c] sm:$0xf]
    %v236 = vld [vmem:[#allocation4 + $0x180] sm:$0xf]
    %v237 = vld [vmem:[#allocation4 + $0x184] sm:$0xf]
    %v238 = vld [vmem:[#allocation4 + $0x188] sm:$0xf]
    %v239 = vld [vmem:[#allocation4 + $0x18c] sm:$0xf]
    %v240 = vld [vmem:[#allocation4 + $0x190] sm:$0xf]
    %v241 = vld [vmem:[#allocation4 + $0x194] sm:$0xf]
    %v242 = vld [vmem:[#allocation4 + $0x198] sm:$0xf]
    %v243 = vld [vmem:[#allocation4 + $0x19c] sm:$0xf]
    %v244 = vld [vmem:[#allocation4 + $0x1a0] sm:$0xf]
    %v245 = vld [vmem:[#allocation4 + $0x1a4] sm:$0xf]
    %v246 = vld [vmem:[#allocation4 + $0x1a8] sm:$0xf]
    %v247 = vld [vmem:[#allocation4 + $0x1ac] sm:$0xf]
    %v248 = vld [vmem:[#allocation4 + $0x1b0] sm:$0xf]
    %v249 = vld [vmem:[#allocation4 + $0x1b4] sm:$0xf]
    %v250 = vld [vmem:[#allocation4 + $0x1b8] sm:$0xf]
    %v251 = vld [vmem:[#allocation4 + $0x1bc] sm:$0xf]
    %v252 = vld [vmem:[#allocation4 + $0x1c0] sm:$0xf]
    %v253 = vld [vmem:[#allocation4 + $0x1c4] sm:$0xf]
    %v254 = vld [vmem:[#allocation4 + $0x1c8] sm:$0xf]
    %v255 = vld [vmem:[#allocation4 + $0x1cc] sm:$0xf]
    %v256 = vld [vmem:[#allocation4 + $0x1d0] sm:$0xf]
    %v257 = vld [vmem:[#allocation4 + $0x1d4] sm:$0xf]
    %v258 = vld [vmem:[#allocation4 + $0x1d8] sm:$0xf]
    %v259 = vld [vmem:[#allocation4 + $0x1dc] sm:$0xf]
    %v260 = vld [vmem:[#allocation4 + $0x1e0] sm:$0xf]
    %v261 = vld [vmem:[#allocation4 + $0x1e4] sm:$0xf]
    %v262 = vld [vmem:[#allocation4 + $0x1e8] sm:$0xf]
    %v263 = vld [vmem:[#allocation4 + $0x1ec] sm:$0xf]
    %v264 = vld [vmem:[#allocation4 + $0x1f0] sm:$0xf]
    %v265 = vld [vmem:[#allocation4 + $0x1f4] sm:$0xf]
    %v266 = vld [vmem:[#allocation4 + $0x1f8] sm:$0xf]
    %v267 = vld [vmem:[#allocation4 + $0x1fc] sm:$0xf]
    %v268 = vld [vmem:[#allocation4 + $0x200] sm:$0xf]
    %v269 = vld [vmem:[#allocation4 + $0x204] sm:$0xf]
    %v270 = vld [vmem:[#allocation4 + $0x208] sm:$0xf]
    %v271 = vld [vmem:[#allocation4 + $0x20c] sm:$0xf]
    %v272 = vld [vmem:[#allocation4 + $0x210] sm:$0xf]
    %v273 = vld [vmem:[#allocation4 + $0x214] sm:$0xf]
    %v274 = vld [vmem:[#allocation4 + $0x218] sm:$0xf]
    %v275 = vld [vmem:[#allocation4 + $0x21c] sm:$0xf]
    %v276 = vld [vmem:[#allocation4 + $0x220] sm:$0xf]
    %v277 = vld [vmem:[#allocation4 + $0x224] sm:$0xf]
    %v278 = vld [vmem:[#allocation4 + $0x228] sm:$0xf]
    %v279 = vld [vmem:[#allocation4 + $0x22c] sm:$0xf]
    %v280 = vld [vmem:[#allocation4 + $0x230] sm:$0xf]
    %v281 = vld [vmem:[#allocation4 + $0x234] sm:$0xf]
    %v282 = vld [vmem:[#allocation4 + $0x238] sm:$0xf]
    %v283 = vld [vmem:[#allocation4 + $0x23c] sm:$0xf]
    %v284 = vld [vmem:[#allocation4 + $0x240] sm:$0xf]
    %v285 = vld [vmem:[#allocation4 + $0x244] sm:$0xf]
    %v286 = vld [vmem:[#allocation4 + $0x248] sm:$0xf]
    %v287 = vld [vmem:[#allocation4 + $0x24c] sm:$0xf]
    %v288 = vld [vmem:[#allocation4 + $0x250] sm:$0xf]
    %v289 = vld [vmem:[#allocation4 + $0x254] sm:$0xf]
    %v290 = vld [vmem:[#allocation4 + $0x258] sm:$0xf]
    %v291 = vld [vmem:[#allocation4 + $0x25c] sm:$0xf]
    %v292 = vld [vmem:[#allocation4 + $0x260] sm:$0xf]
    %v293 = vld [vmem:[#allocation4 + $0x264] sm:$0xf]
    %v294 = vld [vmem:[#allocation4 + $0x268] sm:$0xf]
    %v295 = vld [vmem:[#allocation4 + $0x26c] sm:$0xf]
    %v296 = vld [vmem:[#allocation4 + $0x270] sm:$0xf]
    %v297 = vld [vmem:[#allocation4 + $0x274] sm:$0xf]
    %v298 = vld [vmem:[#allocation4 + $0x278] sm:$0xf]
    %v299 = vld [vmem:[#allocation4 + $0x27c] sm:$0xf]
    %v300 = vld [vmem:[#allocation4 + $0x280] sm:$0xf]
    %v301 = vld [vmem:[#allocation4 + $0x284] sm:$0xf]
    %v302 = vld [vmem:[#allocation4 + $0x288] sm:$0xf]
    %v303 = vld [vmem:[#allocation4 + $0x28c] sm:$0xf]
    %v304 = vld [vmem:[#allocation4 + $0x290] sm:$0xf]
    %v305 = vld [vmem:[#allocation4 + $0x294] sm:$0xf]
    %v306 = vld [vmem:[#allocation4 + $0x298] sm:$0xf]
    %v307 = vld [vmem:[#allocation4 + $0x29c] sm:$0xf]
    %v308 = vld [vmem:[#allocation4 + $0x2a0] sm:$0xf]
    %v309 = vld [vmem:[#allocation4 + $0x2a4] sm:$0xf]
    %v310 = vld [vmem:[#allocation4 + $0x2a8] sm:$0xf]
    %v311 = vld [vmem:[#allocation4 + $0x2ac] sm:$0xf]
    %v312 = vld [vmem:[#allocation4 + $0x2b0] sm:$0xf]
    %v313 = vld [vmem:[#allocation4 + $0x2b4] sm:$0xf]
    %v314 = vld [vmem:[#allocation4 + $0x2b8] sm:$0xf]
    %v315 = vld [vmem:[#allocation4 + $0x2bc] sm:$0xf]
    %v316 = vld [vmem:[#allocation4 + $0x2c0] sm:$0xf]
    %v317 = vld [vmem:[#allocation4 + $0x2c4] sm:$0xf]
    %v318 = vld [vmem:[#allocation4 + $0x2c8] sm:$0xf]
    %v319 = vld [vmem:[#allocation4 + $0x2cc] sm:$0xf]
    %v320 = vld [vmem:[#allocation4 + $0x2d0] sm:$0xf]
    %v321 = vld [vmem:[#allocation4 + $0x2d4] sm:$0xf]
    %v322 = vld [vmem:[#allocation4 + $0x2d8] sm:$0xf]
    %v323 = vld [vmem:[#allocation4 + $0x2dc] sm:$0xf]
    %v324 = vld [vmem:[#allocation4 + $0x2e0] sm:$0xf]
    %v325 = vld [vmem:[#allocation4 + $0x2e4] sm:$0xf]
    %v326 = vld [vmem:[#allocation4 + $0x2e8] sm:$0xf]
    %v327 = vld [vmem:[#allocation4 + $0x2ec] sm:$0xf]
    %v328 = vld [vmem:[#allocation4 + $0x2f0] sm:$0xf]
    %v329 = vld [vmem:[#allocation4 + $0x2f4] sm:$0xf]
    %v330 = vld [vmem:[#allocation4 + $0x2f8] sm:$0xf]
    %v331 = vld [vmem:[#allocation4 + $0x2fc] sm:$0xf]
    %v332 = vld [vmem:[#allocation4 + $0x300] sm:$0xf]
    %v333 = vld [vmem:[#allocation4 + $0x304] sm:$0xf]
    %v334 = vld [vmem:[#allocation4 + $0x308] sm:$0xf]
    %v335 = vld [vmem:[#allocation4 + $0x30c] sm:$0xf]
    %v336 = vld [vmem:[#allocation4 + $0x310] sm:$0xf]
    %v337 = vld [vmem:[#allocation4 + $0x314] sm:$0xf]
    %v338 = vld [vmem:[#allocation4 + $0x318] sm:$0xf]
    %v339 = vld [vmem:[#allocation4 + $0x31c] sm:$0xf]
    %v340 = vld [vmem:[#allocation4 + $0x320] sm:$0xf]
    %v341 = vld [vmem:[#allocation4 + $0x324] sm:$0xf]
    %v342 = vld [vmem:[#allocation4 + $0x328] sm:$0xf]
    %v343 = vld [vmem:[#allocation4 + $0x32c] sm:$0xf]
    %v344 = vld [vmem:[#allocation4 + $0x330] sm:$0xf]
    %v345 = vld [vmem:[#allocation4 + $0x334] sm:$0xf]
    %v346 = vld [vmem:[#allocation4 + $0x338] sm:$0xf]
    %v347 = vld [vmem:[#allocation4 + $0x33c] sm:$0xf]
    %v348 = vld [vmem:[#allocation4 + $0x340] sm:$0xf]
    %v349 = vld [vmem:[#allocation4 + $0x344] sm:$0xf]
    %v350 = vld [vmem:[#allocation4 + $0x348] sm:$0xf]
    %v351 = vld [vmem:[#allocation4 + $0x34c] sm:$0xf]
    %v352 = vld [vmem:[#allocation4 + $0x350] sm:$0xf]
    %v353 = vld [vmem:[#allocation4 + $0x354] sm:$0xf]
    %v354 = vld [vmem:[#allocation4 + $0x358] sm:$0xf]
    %v355 = vld [vmem:[#allocation4 + $0x35c] sm:$0xf]
    %v356 = vld [vmem:[#allocation4 + $0x360] sm:$0xf]
    %v357 = vld [vmem:[#allocation4 + $0x364] sm:$0xf]
    %v358 = vld [vmem:[#allocation4 + $0x368] sm:$0xf]
    %v359 = vld [vmem:[#allocation4 + $0x36c] sm:$0xf]
    %v360 = vld [vmem:[#allocation4 + $0x370] sm:$0xf]
    %v361 = vld [vmem:[#allocation4 + $0x374] sm:$0xf]
    %v362 = vld [vmem:[#allocation4 + $0x378] sm:$0xf]
    %v363 = vld [vmem:[#allocation4 + $0x37c] sm:$0xf]
    %v364 = vld [vmem:[#allocation4 + $0x380] sm:$0xf]
    %v365 = vld [vmem:[#allocation4 + $0x384] sm:$0xf]
    %v366 = vld [vmem:[#allocation4 + $0x388] sm:$0xf]
    %v367 = vld [vmem:[#allocation4 + $0x38c] sm:$0xf]
    %v368 = vld [vmem:[#allocation4 + $0x390] sm:$0xf]
    %v369 = vld [vmem:[#allocation4 + $0x394] sm:$0xf]
    %v370 = vld [vmem:[#allocation4 + $0x398] sm:$0xf]
    %v371 = vld [vmem:[#allocation4 + $0x39c] sm:$0xf]
    %v372 = vld [vmem:[#allocation4 + $0x3a0] sm:$0xf]
    %v373 = vld [vmem:[#allocation4 + $0x3a4] sm:$0xf]
    %v374 = vld [vmem:[#allocation4 + $0x3a8] sm:$0xf]
    %v375 = vld [vmem:[#allocation4 + $0x3ac] sm:$0xf]
    %v376 = vld [vmem:[#allocation4 + $0x3b0] sm:$0xf]
    %v377 = vld [vmem:[#allocation4 + $0x3b4] sm:$0xf]
    %v378 = vld [vmem:[#allocation4 + $0x3b8] sm:$0xf]
    %v379 = vld [vmem:[#allocation4 + $0x3bc] sm:$0xf]
    %v380 = vld [vmem:[#allocation4 + $0x3c0] sm:$0xf]
    %v381 = vld [vmem:[#allocation4 + $0x3c4] sm:$0xf]
    %v382 = vld [vmem:[#allocation4 + $0x3c8] sm:$0xf]
    %v383 = vld [vmem:[#allocation4 + $0x3cc] sm:$0xf]
    %v384 = vld [vmem:[#allocation4 + $0x3d0] sm:$0xf]
    %v385 = vld [vmem:[#allocation4 + $0x3d4] sm:$0xf]
    %v386 = vld [vmem:[#allocation4 + $0x3d8] sm:$0xf]
    %v387 = vld [vmem:[#allocation4 + $0x3dc] sm:$0xf]
    %v388 = vld [vmem:[#allocation4 + $0x3e0] sm:$0xf]
    %v389 = vld [vmem:[#allocation4 + $0x3e4] sm:$0xf]
    %v390 = vld [vmem:[#allocation4 + $0x3e8] sm:$0xf]
    %v391 = vld [vmem:[#allocation4 + $0x3ec] sm:$0xf]
    %v392 = vld [vmem:[#allocation4 + $0x3f0] sm:$0xf]
    %v393 = vld [vmem:[#allocation4 + $0x3f4] sm:$0xf]
    %v394 = vld [vmem:[#allocation4 + $0x3f8] sm:$0xf]
    %v395 = vld [vmem:[#allocation4 + $0x3fc] sm:$0xf]
    %v396 = vld [vmem:[#allocation4 + $0x400] sm:$0xf]
    %v397 = vld [vmem:[#allocation4 + $0x404] sm:$0xf]
    %v398 = vld [vmem:[#allocation4 + $0x408] sm:$0xf]
    %v399 = vld [vmem:[#allocation4 + $0x40c] sm:$0xf]
    %v400 = vld [vmem:[#allocation4 + $0x410] sm:$0xf]
    %v401 = vld [vmem:[#allocation4 + $0x414] sm:$0xf]
    %v402 = vld [vmem:[#allocation4 + $0x418] sm:$0xf]
    %v403 = vld [vmem:[#allocation4 + $0x41c] sm:$0xf]
    %v404 = vld [vmem:[#allocation4 + $0x420] sm:$0xf]
    %v405 = vld [vmem:[#allocation4 + $0x424] sm:$0xf]
    %v406 = vld [vmem:[#allocation4 + $0x428] sm:$0xf]
    %v407 = vld [vmem:[#allocation4 + $0x42c] sm:$0xf]
    %v408 = vld [vmem:[#allocation4 + $0x430] sm:$0xf]
    %v409 = vld [vmem:[#allocation4 + $0x434] sm:$0xf]
    %v410 = vld [vmem:[#allocation4 + $0x438] sm:$0xf]
    %v411 = vld [vmem:[#allocation4 + $0x43c] sm:$0xf]
    %v412 = vld [vmem:[#allocation4 + $0x440] sm:$0xf]
    %v413 = vld [vmem:[#allocation4 + $0x444] sm:$0xf]
    %v414 = vld [vmem:[#allocation4 + $0x448] sm:$0xf]
    %v415 = vld [vmem:[#allocation4 + $0x44c] sm:$0xf]
    %v416 = vld [vmem:[#allocation4 + $0x450] sm:$0xf]
    %v417 = vld [vmem:[#allocation4 + $0x454] sm:$0xf]
    %v418 = vld [vmem:[#allocation4 + $0x458] sm:$0xf]
    %v419 = vld [vmem:[#allocation4 + $0x45c] sm:$0xf]
    %v420 = vld [vmem:[#allocation4 + $0x460] sm:$0xf]
    %v421 = vld [vmem:[#allocation4 + $0x464] sm:$0xf]
    %v422 = vld [vmem:[#allocation4 + $0x468] sm:$0xf]
    %v423 = vld [vmem:[#allocation4 + $0x46c] sm:$0xf]
    %v424 = vld [vmem:[#allocation4 + $0x470] sm:$0xf]
    %v425 = vld [vmem:[#allocation4 + $0x474] sm:$0xf]
    %v426 = vld [vmem:[#allocation4 + $0x478] sm:$0xf]
    %v427 = vld [vmem:[#allocation4 + $0x47c] sm:$0xf]
    %v428 = vld [vmem:[#allocation4 + $0x480] sm:$0xf]
    %v429 = vld [vmem:[#allocation4 + $0x484] sm:$0xf]
    %v430 = vld [vmem:[#allocation4 + $0x488] sm:$0xf]
    %v431 = vld [vmem:[#allocation4 + $0x48c] sm:$0xf]
    %v432 = vld [vmem:[#allocation4 + $0x490] sm:$0xf]
    %v433 = vld [vmem:[#allocation4 + $0x494] sm:$0xf]
    %v434 = vld [vmem:[#allocation4 + $0x498] sm:$0xf]
    %v435 = vld [vmem:[#allocation4 + $0x49c] sm:$0xf]
    %v436 = vld [vmem:[#allocation4 + $0x4a0] sm:$0xf]
    %v437 = vld [vmem:[#allocation4 + $0x4a4] sm:$0xf]
    %v438 = vld [vmem:[#allocation4 + $0x4a8] sm:$0xf]
    %v439 = vld [vmem:[#allocation4 + $0x4ac] sm:$0xf]
    %v440 = vld [vmem:[#allocation4 + $0x4b0] sm:$0xf]
    %v441 = vld [vmem:[#allocation4 + $0x4b4] sm:$0xf]
    %v442 = vld [vmem:[#allocation4 + $0x4b8] sm:$0xf]
    %v443 = vld [vmem:[#allocation4 + $0x4bc] sm:$0xf]
    %v444 = vld [vmem:[#allocation4 + $0x4c0] sm:$0xf]
    %v445 = vld [vmem:[#allocation4 + $0x4c4] sm:$0xf]
    %v446 = vld [vmem:[#allocation4 + $0x4c8] sm:$0xf]
    %v447 = vld [vmem:[#allocation4 + $0x4cc] sm:$0xf]
    %v448 = vld [vmem:[#allocation4 + $0x4d0] sm:$0xf]
    %v449 = vld [vmem:[#allocation4 + $0x4d4] sm:$0xf]
    %v450 = vld [vmem:[#allocation4 + $0x4d8] sm:$0xf]
    %v451 = vld [vmem:[#allocation4 + $0x4dc] sm:$0xf]
    %v452 = vld [vmem:[#allocation4 + $0x4e0] sm:$0xf]
    %v453 = vld [vmem:[#allocation4 + $0x4e4] sm:$0xf]
    %v454 = vld [vmem:[#allocation4 + $0x4e8] sm:$0xf]
    %v455 = vld [vmem:[#allocation4 + $0x4ec] sm:$0xf]
    %v456 = vld [vmem:[#allocation4 + $0x4f0] sm:$0xf]
    %v457 = vld [vmem:[#allocation4 + $0x4f4] sm:$0xf]
    %v458 = vld [vmem:[#allocation4 + $0x4f8] sm:$0xf]
    %v459 = vld [vmem:[#allocation4 + $0x4fc] sm:$0xf]
    %v460 = vld [vmem:[#allocation4 + $0x500] sm:$0xf]
    %v461 = vld [vmem:[#allocation4 + $0x504] sm:$0xf]
    %v462 = vld [vmem:[#allocation4 + $0x508] sm:$0xf]
    %v463 = vld [vmem:[#allocation4 + $0x50c] sm:$0xf]
    %v464 = vld [vmem:[#allocation4 + $0x510] sm:$0xf]
    %v465 = vld [vmem:[#allocation4 + $0x514] sm:$0xf]
    %v466 = vld [vmem:[#allocation4 + $0x518] sm:$0xf]
    %v467 = vld [vmem:[#allocation4 + $0x51c] sm:$0xf]
    %v468 = vld [vmem:[#allocation4 + $0x520] sm:$0xf]
    %v469 = vld [vmem:[#allocation4 + $0x524] sm:$0xf]
    %v470 = vld [vmem:[#allocation4 + $0x528] sm:$0xf]
    %v471 = vld [vmem:[#allocation4 + $0x52c] sm:$0xf]
    %v472 = vld [vmem:[#allocation4 + $0x530] sm:$0xf]
    %v473 = vld [vmem:[#allocation4 + $0x534] sm:$0xf]
    %v474 = vld [vmem:[#allocation4 + $0x538] sm:$0xf]
    %v475 = vld [vmem:[#allocation4 + $0x53c] sm:$0xf]
    %v476 = vld [vmem:[#allocation4 + $0x540] sm:$0xf]
    %v477 = vld [vmem:[#allocation4 + $0x544] sm:$0xf]
    %v478 = vld [vmem:[#allocation4 + $0x548] sm:$0xf]
    %v479 = vld [vmem:[#allocation4 + $0x54c] sm:$0xf]
    %v480 = vld [vmem:[#allocation4 + $0x550] sm:$0xf]
    %v481 = vld [vmem:[#allocation4 + $0x554] sm:$0xf]
    %v482 = vld [vmem:[#allocation4 + $0x558] sm:$0xf]
    %v483 = vld [vmem:[#allocation4 + $0x55c] sm:$0xf]
    %v484 = vld [vmem:[#allocation4 + $0x560] sm:$0xf]
    %v485 = vld [vmem:[#allocation4 + $0x564] sm:$0xf]
    %v486 = vld [vmem:[#allocation4 + $0x568] sm:$0xf]
    %v487 = vld [vmem:[#allocation4 + $0x56c] sm:$0xf]
    %v488 = vld [vmem:[#allocation4 + $0x570] sm:$0xf]
    %v489 = vld [vmem:[#allocation4 + $0x574] sm:$0xf]
    %v490 = vld [vmem:[#allocation4 + $0x578] sm:$0xf]
    %v491 = vld [vmem:[#allocation4 + $0x57c] sm:$0xf]
    %v492 = vld [vmem:[#allocation4 + $0x580] sm:$0xf]
    %v493 = vld [vmem:[#allocation4 + $0x584] sm:$0xf]
    %v494 = vld [vmem:[#allocation4 + $0x588] sm:$0xf]
    %v495 = vld [vmem:[#allocation4 + $0x58c] sm:$0xf]
    %v496 = vld [vmem:[#allocation4 + $0x590] sm:$0xf]
    %v497 = vld [vmem:[#allocation4 + $0x594] sm:$0xf]
    %v498 = vld [vmem:[#allocation4 + $0x598] sm:$0xf]
    %v499 = vld [vmem:[#allocation4 + $0x59c] sm:$0xf]
    %v500 = vld [vmem:[#allocation4 + $0x5a0] sm:$0xf]
    %v501 = vld [vmem:[#allocation4 + $0x5a4] sm:$0xf]
    %v502 = vld [vmem:[#allocation4 + $0x5a8] sm:$0xf]
    %v503 = vld [vmem:[#allocation4 + $0x5ac] sm:$0xf]
    %v504 = vld [vmem:[#allocation4 + $0x5b0] sm:$0xf]
    %v505 = vld [vmem:[#allocation4 + $0x5b4] sm:$0xf]
    %v506 = vld [vmem:[#allocation4 + $0x5b8] sm:$0xf]
    %v507 = vld [vmem:[#allocation4 + $0x5bc] sm:$0xf]
    %v508 = vld [vmem:[#allocation4 + $0x5c0] sm:$0xf]
    %v509 = vld [vmem:[#allocation4 + $0x5c4] sm:$0xf]
    %v510 = vld [vmem:[#allocation4 + $0x5c8] sm:$0xf]
    %v511 = vld [vmem:[#allocation4 + $0x5cc] sm:$0xf]
    %v512 = vld [vmem:[#allocation4 + $0x5d0] sm:$0xf]
    %v513 = vld [vmem:[#allocation4 + $0x5d4] sm:$0xf]
    %v514 = vld [vmem:[#allocation4 + $0x5d8] sm:$0xf]
    %v515 = vld [vmem:[#allocation4 + $0x5dc] sm:$0xf]
    %v516 = vld [vmem:[#allocation4 + $0x5e0] sm:$0xf]
    %v517 = vld [vmem:[#allocation4 + $0x5e4] sm:$0xf]
    %v518 = vld [vmem:[#allocation4 + $0x5e8] sm:$0xf]
    %v519 = vld [vmem:[#allocation4 + $0x5ec] sm:$0xf]
    %v520 = vld [vmem:[#allocation4 + $0x5f0] sm:$0xf]
    %v521 = vld [vmem:[#allocation4 + $0x5f4] sm:$0xf]
    %v522 = vld [vmem:[#allocation4 + $0x5f8] sm:$0xf]
    %v523 = vld [vmem:[#allocation4 + $0x5fc] sm:$0xf]
    %v524 = vld [vmem:[#allocation4 + $0x600] sm:$0xf]
    %v525 = vld [vmem:[#allocation4 + $0x604] sm:$0xf]
    %v526 = vld [vmem:[#allocation4 + $0x608] sm:$0xf]
    %v527 = vld [vmem:[#allocation4 + $0x60c] sm:$0xf]
    %v528 = vld [vmem:[#allocation4 + $0x610] sm:$0xf]
    %v529 = vld [vmem:[#allocation4 + $0x614] sm:$0xf]
    %v530 = vld [vmem:[#allocation4 + $0x618] sm:$0xf]
    %v531 = vld [vmem:[#allocation4 + $0x61c] sm:$0xf]
    %v532 = vld [vmem:[#allocation4 + $0x620] sm:$0xf]
    %v533 = vld [vmem:[#allocation4 + $0x624] sm:$0xf]
    %v534 = vld [vmem:[#allocation4 + $0x628] sm:$0xf]
    %v535 = vld [vmem:[#allocation4 + $0x62c] sm:$0xf]
    %v536 = vld [vmem:[#allocation4 + $0x630] sm:$0xf]
    %v537 = vld [vmem:[#allocation4 + $0x634] sm:$0xf]
    %v538 = vld [vmem:[#allocation4 + $0x638] sm:$0xf]
    %v539 = vld [vmem:[#allocation4 + $0x63c] sm:$0xf]
    %v540 = vld [vmem:[#allocation4 + $0x640] sm:$0xf]
    %v541 = vld [vmem:[#allocation4 + $0x644] sm:$0xf]
    %v542 = vld [vmem:[#allocation4 + $0x648] sm:$0xf]
    %v543 = vld [vmem:[#allocation4 + $0x64c] sm:$0xf]
    %v544 = vld [vmem:[#allocation4 + $0x650] sm:$0xf]
    %v545 = vld [vmem:[#allocation4 + $0x654] sm:$0xf]
    %v546 = vld [vmem:[#allocation4 + $0x658] sm:$0xf]
    %v547 = vld [vmem:[#allocation4 + $0x65c] sm:$0xf]
    %v548 = vld [vmem:[#allocation4 + $0x660] sm:$0xf]
    %v549 = vld [vmem:[#allocation4 + $0x664] sm:$0xf]
    %v550 = vld [vmem:[#allocation4 + $0x668] sm:$0xf]
    %v551 = vld [vmem:[#allocation4 + $0x66c] sm:$0xf]
    %v552 = vld [vmem:[#allocation4 + $0x670] sm:$0xf]
    %v553 = vld [vmem:[#allocation4 + $0x674] sm:$0xf]
    %v554 = vld [vmem:[#allocation4 + $0x678] sm:$0xf]
    %v555 = vld [vmem:[#allocation4 + $0x67c] sm:$0xf]
    %v556 = vld [vmem:[#allocation4 + $0x680] sm:$0xf]
    %v557 = vld [vmem:[#allocation4 + $0x684] sm:$0xf]
    %v558 = vld [vmem:[#allocation4 + $0x688] sm:$0xf]
    %v559 = vld [vmem:[#allocation4 + $0x68c] sm:$0xf]
    %v560 = vld [vmem:[#allocation4 + $0x690] sm:$0xf]
    %v561 = vld [vmem:[#allocation4 + $0x694] sm:$0xf]
    %v562 = vld [vmem:[#allocation4 + $0x698] sm:$0xf]
    %v563 = vld [vmem:[#allocation4 + $0x69c] sm:$0xf]
    %v564 = vld [vmem:[#allocation4 + $0x6a0] sm:$0xf]
    %v565 = vld [vmem:[#allocation4 + $0x6a4] sm:$0xf]
    %v566 = vld [vmem:[#allocation4 + $0x6a8] sm:$0xf]
    %v567 = vld [vmem:[#allocation4 + $0x6ac] sm:$0xf]
    %v568 = vld [vmem:[#allocation4 + $0x6b0] sm:$0xf]
    %v569 = vld [vmem:[#allocation4 + $0x6b4] sm:$0xf]
    %v570 = vld [vmem:[#allocation4 + $0x6b8] sm:$0xf]
    %v571 = vld [vmem:[#allocation4 + $0x6bc] sm:$0xf]
    %v572 = vld [vmem:[#allocation4 + $0x6c0] sm:$0xf]
    %v573 = vld [vmem:[#allocation4 + $0x6c4] sm:$0xf]
    %v574 = vld [vmem:[#allocation4 + $0x6c8] sm:$0xf]
    %v575 = vld [vmem:[#allocation4 + $0x6cc] sm:$0xf]
    %v576 = vld [vmem:[#allocation4 + $0x6d0] sm:$0xf]
    %v577 = vld [vmem:[#allocation4 + $0x6d4] sm:$0xf]
    %v578 = vld [vmem:[#allocation4 + $0x6d8] sm:$0xf]
    %v579 = vld [vmem:[#allocation4 + $0x6dc] sm:$0xf]
    %v580 = vld [vmem:[#allocation4 + $0x6e0] sm:$0xf]
    %v581 = vld [vmem:[#allocation4 + $0x6e4] sm:$0xf]
    %v582 = vld [vmem:[#allocation4 + $0x6e8] sm:$0xf]
    %v583 = vld [vmem:[#allocation4 + $0x6ec] sm:$0xf]
    %v584 = vld [vmem:[#allocation4 + $0x6f0] sm:$0xf]
    %v585 = vld [vmem:[#allocation4 + $0x6f4] sm:$0xf]
    %v586 = vld [vmem:[#allocation4 + $0x6f8] sm:$0xf]
    %v587 = vld [vmem:[#allocation4 + $0x6fc] sm:$0xf]
    %v588 = vld [vmem:[#allocation4 + $0x700] sm:$0xf]
    %v589 = vld [vmem:[#allocation4 + $0x704] sm:$0xf]
    %v590 = vld [vmem:[#allocation4 + $0x708] sm:$0xf]
    %v591 = vld [vmem:[#allocation4 + $0x70c] sm:$0xf]
    %v592 = vld [vmem:[#allocation4 + $0x710] sm:$0xf]
    %v593 = vld [vmem:[#allocation4 + $0x714] sm:$0xf]
    %v594 = vld [vmem:[#allocation4 + $0x718] sm:$0xf]
    %v595 = vld [vmem:[#allocation4 + $0x71c] sm:$0xf]
    %v596 = vld [vmem:[#allocation4 + $0x720] sm:$0xf]
    %v597 = vld [vmem:[#allocation4 + $0x724] sm:$0xf]
    %v598 = vld [vmem:[#allocation4 + $0x728] sm:$0xf]
    %v599 = vld [vmem:[#allocation4 + $0x72c] sm:$0xf]
    %v600 = vld [vmem:[#allocation4 + $0x730] sm:$0xf]
    %v601 = vld [vmem:[#allocation4 + $0x734] sm:$0xf]
    %v602 = vld [vmem:[#allocation4 + $0x738] sm:$0xf]
    %v603 = vld [vmem:[#allocation4 + $0x73c] sm:$0xf]
    %v604 = vld [vmem:[#allocation4 + $0x740] sm:$0xf]
    %v605 = vld [vmem:[#allocation4 + $0x744] sm:$0xf]
    %v606 = vld [vmem:[#allocation4 + $0x748] sm:$0xf]
    %v607 = vld [vmem:[#allocation4 + $0x74c] sm:$0xf]
    %v608 = vld [vmem:[#allocation4 + $0x750] sm:$0xf]
    %v609 = vld [vmem:[#allocation4 + $0x754] sm:$0xf]
    %v610 = vld [vmem:[#allocation4 + $0x758] sm:$0xf]
    %v611 = vld [vmem:[#allocation4 + $0x75c] sm:$0xf]
    %v612 = vld [vmem:[#allocation4 + $0x760] sm:$0xf]
    %v613 = vld [vmem:[#allocation4 + $0x764] sm:$0xf]
    %v614 = vld [vmem:[#allocation4 + $0x768] sm:$0xf]
    %v615 = vld [vmem:[#allocation4 + $0x76c] sm:$0xf]
    %v616 = vld [vmem:[#allocation4 + $0x770] sm:$0xf]
    %v617 = vld [vmem:[#allocation4 + $0x774] sm:$0xf]
    %v618 = vld [vmem:[#allocation4 + $0x778] sm:$0xf]
    %v619 = vld [vmem:[#allocation4 + $0x77c] sm:$0xf]
    %v620 = vld [vmem:[#allocation4 + $0x780] sm:$0xf]
    %v621 = vld [vmem:[#allocation4 + $0x784] sm:$0xf]
    %v622 = vld [vmem:[#allocation4 + $0x788] sm:$0xf]
    %v623 = vld [vmem:[#allocation4 + $0x78c] sm:$0xf]
    %v624 = vld [vmem:[#allocation4 + $0x790] sm:$0xf]
    %v625 = vld [vmem:[#allocation4 + $0x794] sm:$0xf]
    %v626 = vld [vmem:[#allocation4 + $0x798] sm:$0xf]
    %v627 = vld [vmem:[#allocation4 + $0x79c] sm:$0xf]
    %v628 = vld [vmem:[#allocation4 + $0x7a0] sm:$0xf]
    %v629 = vld [vmem:[#allocation4 + $0x7a4] sm:$0xf]
    %v630 = vld [vmem:[#allocation4 + $0x7a8] sm:$0xf]
    %v631 = vld [vmem:[#allocation4 + $0x7ac] sm:$0xf]
    %v632 = vld [vmem:[#allocation4 + $0x7b0] sm:$0xf]
    %v633 = vld [vmem:[#allocation4 + $0x7b4] sm:$0xf]
    %v634 = vld [vmem:[#allocation4 + $0x7b8] sm:$0xf]
    %v635 = vld [vmem:[#allocation4 + $0x7bc] sm:$0xf]
    %v636 = vld [vmem:[#allocation4 + $0x7c0] sm:$0xf]
    %v637 = vld [vmem:[#allocation4 + $0x7c4] sm:$0xf]
    %v638 = vld [vmem:[#allocation4 + $0x7c8] sm:$0xf]
    %v639 = vld [vmem:[#allocation4 + $0x7cc] sm:$0xf]
    %v640 = vld [vmem:[#allocation4 + $0x7d0] sm:$0xf]
    %v641 = vld [vmem:[#allocation4 + $0x7d4] sm:$0xf]
    %v642 = vld [vmem:[#allocation4 + $0x7d8] sm:$0xf]
    %v643 = vld [vmem:[#allocation4 + $0x7dc] sm:$0xf]
    %v644 = vld [vmem:[#allocation4 + $0x7e0] sm:$0xf]
    %v645 = vld [vmem:[#allocation4 + $0x7e4] sm:$0xf]
    %v646 = vld [vmem:[#allocation4 + $0x7e8] sm:$0xf]
    %v647 = vld [vmem:[#allocation4 + $0x7ec] sm:$0xf]
    %v648 = vld [vmem:[#allocation4 + $0x7f0] sm:$0xf]
    %v649 = vld [vmem:[#allocation4 + $0x7f4] sm:$0xf]
    %v650 = vld [vmem:[#allocation4 + $0x7f8] sm:$0xf]
    %v651 = vld [vmem:[#allocation4 + $0x7fc] sm:$0xf]
    %v1164 = vunpack.c.l.b16 %v140
    %v1165 = vunpack.c.l.b16 %v141
    %v1166 = vunpack.c.l.b16 %v142
    %v1167 = vunpack.c.l.b16 %v143
    %v1168 = vunpack.c.l.b16 %v144
    %v1169 = vunpack.c.l.b16 %v145
    %v1170 = vunpack.c.l.b16 %v146
    %v1171 = vunpack.c.l.b16 %v147
    %v1172 = vunpack.c.l.b16 %v148
    %v1173 = vunpack.c.l.b16 %v149
    %v1174 = vunpack.c.l.b16 %v150
    %v1175 = vunpack.c.l.b16 %v151
    %v1176 = vunpack.c.l.b16 %v152
    %v1177 = vunpack.c.l.b16 %v153
    %v1178 = vunpack.c.l.b16 %v154
    %v1179 = vunpack.c.l.b16 %v155
    %v1180 = vunpack.c.l.b16 %v156
    %v1181 = vunpack.c.l.b16 %v157
    %v1182 = vunpack.c.l.b16 %v158
    %v1183 = vunpack.c.l.b16 %v159
    %v1184 = vunpack.c.l.b16 %v160
    %v1185 = vunpack.c.l.b16 %v161
    %v1186 = vunpack.c.l.b16 %v162
    %v1187 = vunpack.c.l.b16 %v163
    %v1188 = vunpack.c.l.b16 %v164
    %v1189 = vunpack.c.l.b16 %v165
    %v1190 = vunpack.c.l.b16 %v166
    %v1191 = vunpack.c.l.b16 %v167
    %v1192 = vunpack.c.l.b16 %v168
    %v1193 = vunpack.c.l.b16 %v169
    %v1194 = vunpack.c.l.b16 %v170
    %v1195 = vunpack.c.l.b16 %v171
    %v1196 = vunpack.c.l.b16 %v172
    %v1197 = vunpack.c.l.b16 %v173
    %v1198 = vunpack.c.l.b16 %v174
    %v1199 = vunpack.c.l.b16 %v175
    %v1200 = vunpack.c.l.b16 %v176
    %v1201 = vunpack.c.l.b16 %v177
    %v1202 = vunpack.c.l.b16 %v178
    %v1203 = vunpack.c.l.b16 %v179
    %v1204 = vunpack.c.l.b16 %v180
    %v1205 = vunpack.c.l.b16 %v181
    %v1206 = vunpack.c.l.b16 %v182
    %v1207 = vunpack.c.l.b16 %v183
    %v1208 = vunpack.c.l.b16 %v184
    %v1209 = vunpack.c.l.b16 %v185
    %v1210 = vunpack.c.l.b16 %v186
    %v1211 = vunpack.c.l.b16 %v187
    %v1212 = vunpack.c.l.b16 %v188
    %v1213 = vunpack.c.l.b16 %v189
    %v1214 = vunpack.c.l.b16 %v190
    %v1215 = vunpack.c.l.b16 %v191
    %v1216 = vunpack.c.l.b16 %v192
    %v1217 = vunpack.c.l.b16 %v193
    %v1218 = vunpack.c.l.b16 %v194
    %v1219 = vunpack.c.l.b16 %v195
    %v1220 = vunpack.c.l.b16 %v196
    %v1221 = vunpack.c.l.b16 %v197
    %v1222 = vunpack.c.l.b16 %v198
    %v1223 = vunpack.c.l.b16 %v199
    %v1224 = vunpack.c.l.b16 %v200
    %v1225 = vunpack.c.l.b16 %v201
    %v1226 = vunpack.c.l.b16 %v202
    %v1227 = vunpack.c.l.b16 %v203
    %v1228 = vunpack.c.l.b16 %v204
    %v1229 = vunpack.c.l.b16 %v205
    %v1230 = vunpack.c.l.b16 %v206
    %v1231 = vunpack.c.l.b16 %v207
    %v1232 = vunpack.c.l.b16 %v208
    %v1233 = vunpack.c.l.b16 %v209
    %v1234 = vunpack.c.l.b16 %v210
    %v1235 = vunpack.c.l.b16 %v211
    %v1236 = vunpack.c.l.b16 %v212
    %v1237 = vunpack.c.l.b16 %v213
    %v1238 = vunpack.c.l.b16 %v214
    %v1239 = vunpack.c.l.b16 %v215
    %v1240 = vunpack.c.l.b16 %v216
    %v1241 = vunpack.c.l.b16 %v217
    %v1242 = vunpack.c.l.b16 %v218
    %v1243 = vunpack.c.l.b16 %v219
    %v1244 = vunpack.c.l.b16 %v220
    %v1245 = vunpack.c.l.b16 %v221
    %v1246 = vunpack.c.l.b16 %v222
    %v1247 = vunpack.c.l.b16 %v223
    %v1248 = vunpack.c.l.b16 %v224
    %v1249 = vunpack.c.l.b16 %v225
    %v1250 = vunpack.c.l.b16 %v226
    %v1251 = vunpack.c.l.b16 %v227
    %v1252 = vunpack.c.l.b16 %v228
    %v1253 = vunpack.c.l.b16 %v229
    %v1254 = vunpack.c.l.b16 %v230
    %v1255 = vunpack.c.l.b16 %v231
    %v1256 = vunpack.c.l.b16 %v232
    %v1257 = vunpack.c.l.b16 %v233
    %v1258 = vunpack.c.l.b16 %v234
    %v1259 = vunpack.c.l.b16 %v235
    %v1260 = vunpack.c.l.b16 %v236
    %v1261 = vunpack.c.l.b16 %v237
    %v1262 = vunpack.c.l.b16 %v238
    %v1263 = vunpack.c.l.b16 %v239
    %v1264 = vunpack.c.l.b16 %v240
    %v1265 = vunpack.c.l.b16 %v241
    %v1266 = vunpack.c.l.b16 %v242
    %v1267 = vunpack.c.l.b16 %v243
    %v1268 = vunpack.c.l.b16 %v244
    %v1269 = vunpack.c.l.b16 %v245
    %v1270 = vunpack.c.l.b16 %v246
    %v1271 = vunpack.c.l.b16 %v247
    %v1272 = vunpack.c.l.b16 %v248
    %v1273 = vunpack.c.l.b16 %v249
    %v1274 = vunpack.c.l.b16 %v250
    %v1275 = vunpack.c.l.b16 %v251
    %v1276 = vunpack.c.l.b16 %v252
    %v1277 = vunpack.c.l.b16 %v253
    %v1278 = vunpack.c.l.b16 %v254
    %v1279 = vunpack.c.l.b16 %v255
    %v1280 = vunpack.c.l.b16 %v256
    %v1281 = vunpack.c.l.b16 %v257
    %v1282 = vunpack.c.l.b16 %v258
    %v1283 = vunpack.c.l.b16 %v259
    %v1284 = vunpack.c.l.b16 %v260
    %v1285 = vunpack.c.l.b16 %v261
    %v1286 = vunpack.c.l.b16 %v262
    %v1287 = vunpack.c.l.b16 %v263
    %v1288 = vunpack.c.l.b16 %v264
    %v1289 = vunpack.c.l.b16 %v265
    %v1290 = vunpack.c.l.b16 %v266
    %v1291 = vunpack.c.l.b16 %v267
    %v1292 = vunpack.c.l.b16 %v268
    %v1293 = vunpack.c.l.b16 %v269
    %v1294 = vunpack.c.l.b16 %v270
    %v1295 = vunpack.c.l.b16 %v271
    %v1296 = vunpack.c.l.b16 %v272
    %v1297 = vunpack.c.l.b16 %v273
    %v1298 = vunpack.c.l.b16 %v274
    %v1299 = vunpack.c.l.b16 %v275
    %v1300 = vunpack.c.l.b16 %v276
    %v1301 = vunpack.c.l.b16 %v277
    %v1302 = vunpack.c.l.b16 %v278
    %v1303 = vunpack.c.l.b16 %v279
    %v1304 = vunpack.c.l.b16 %v280
    %v1305 = vunpack.c.l.b16 %v281
    %v1306 = vunpack.c.l.b16 %v282
    %v1307 = vunpack.c.l.b16 %v283
    %v1308 = vunpack.c.l.b16 %v284
    %v1309 = vunpack.c.l.b16 %v285
    %v1310 = vunpack.c.l.b16 %v286
    %v1311 = vunpack.c.l.b16 %v287
    %v1312 = vunpack.c.l.b16 %v288
    %v1313 = vunpack.c.l.b16 %v289
    %v1314 = vunpack.c.l.b16 %v290
    %v1315 = vunpack.c.l.b16 %v291
    %v1316 = vunpack.c.l.b16 %v292
    %v1317 = vunpack.c.l.b16 %v293
    %v1318 = vunpack.c.l.b16 %v294
    %v1319 = vunpack.c.l.b16 %v295
    %v1320 = vunpack.c.l.b16 %v296
    %v1321 = vunpack.c.l.b16 %v297
    %v1322 = vunpack.c.l.b16 %v298
    %v1323 = vunpack.c.l.b16 %v299
    %v1324 = vunpack.c.l.b16 %v300
    %v1325 = vunpack.c.l.b16 %v301
    %v1326 = vunpack.c.l.b16 %v302
    %v1327 = vunpack.c.l.b16 %v303
    %v1328 = vunpack.c.l.b16 %v304
    %v1329 = vunpack.c.l.b16 %v305
    %v1330 = vunpack.c.l.b16 %v306
    %v1331 = vunpack.c.l.b16 %v307
    %v1332 = vunpack.c.l.b16 %v308
    %v1333 = vunpack.c.l.b16 %v309
    %v1334 = vunpack.c.l.b16 %v310
    %v1335 = vunpack.c.l.b16 %v311
    %v1336 = vunpack.c.l.b16 %v312
    %v1337 = vunpack.c.l.b16 %v313
    %v1338 = vunpack.c.l.b16 %v314
    %v1339 = vunpack.c.l.b16 %v315
    %v1340 = vunpack.c.l.b16 %v316
    %v1341 = vunpack.c.l.b16 %v317
    %v1342 = vunpack.c.l.b16 %v318
    %v1343 = vunpack.c.l.b16 %v319
    %v1344 = vunpack.c.l.b16 %v320
    %v1345 = vunpack.c.l.b16 %v321
    %v1346 = vunpack.c.l.b16 %v322
    %v1347 = vunpack.c.l.b16 %v323
    %v1348 = vunpack.c.l.b16 %v324
    %v1349 = vunpack.c.l.b16 %v325
    %v1350 = vunpack.c.l.b16 %v326
    %v1351 = vunpack.c.l.b16 %v327
    %v1352 = vunpack.c.l.b16 %v328
    %v1353 = vunpack.c.l.b16 %v329
    %v1354 = vunpack.c.l.b16 %v330
    %v1355 = vunpack.c.l.b16 %v331
    %v1356 = vunpack.c.l.b16 %v332
    %v1357 = vunpack.c.l.b16 %v333
    %v1358 = vunpack.c.l.b16 %v334
    %v1359 = vunpack.c.l.b16 %v335
    %v1360 = vunpack.c.l.b16 %v336
    %v1361 = vunpack.c.l.b16 %v337
    %v1362 = vunpack.c.l.b16 %v338
    %v1363 = vunpack.c.l.b16 %v339
    %v1364 = vunpack.c.l.b16 %v340
    %v1365 = vunpack.c.l.b16 %v341
    %v1366 = vunpack.c.l.b16 %v342
    %v1367 = vunpack.c.l.b16 %v343
    %v1368 = vunpack.c.l.b16 %v344
    %v1369 = vunpack.c.l.b16 %v345
    %v1370 = vunpack.c.l.b16 %v346
    %v1371 = vunpack.c.l.b16 %v347
    %v1372 = vunpack.c.l.b16 %v348
    %v1373 = vunpack.c.l.b16 %v349
    %v1374 = vunpack.c.l.b16 %v350
    %v1375 = vunpack.c.l.b16 %v351
    %v1376 = vunpack.c.l.b16 %v352
    %v1377 = vunpack.c.l.b16 %v353
    %v1378 = vunpack.c.l.b16 %v354
    %v1379 = vunpack.c.l.b16 %v355
    %v1380 = vunpack.c.l.b16 %v356
    %v1381 = vunpack.c.l.b16 %v357
    %v1382 = vunpack.c.l.b16 %v358
    %v1383 = vunpack.c.l.b16 %v359
    %v1384 = vunpack.c.l.b16 %v360
    %v1385 = vunpack.c.l.b16 %v361
    %v1386 = vunpack.c.l.b16 %v362
    %v1387 = vunpack.c.l.b16 %v363
    %v1388 = vunpack.c.l.b16 %v364
    %v1389 = vunpack.c.l.b16 %v365
    %v1390 = vunpack.c.l.b16 %v366
    %v1391 = vunpack.c.l.b16 %v367
    %v1392 = vunpack.c.l.b16 %v368
    %v1393 = vunpack.c.l.b16 %v369
    %v1394 = vunpack.c.l.b16 %v370
    %v1395 = vunpack.c.l.b16 %v371
    %v1396 = vunpack.c.l.b16 %v372
    %v1397 = vunpack.c.l.b16 %v373
    %v1398 = vunpack.c.l.b16 %v374
    %v1399 = vunpack.c.l.b16 %v375
    %v1400 = vunpack.c.l.b16 %v376
    %v1401 = vunpack.c.l.b16 %v377
    %v1402 = vunpack.c.l.b16 %v378
    %v1403 = vunpack.c.l.b16 %v379
    %v1404 = vunpack.c.l.b16 %v380
    %v1405 = vunpack.c.l.b16 %v381
    %v1406 = vunpack.c.l.b16 %v382
    %v1407 = vunpack.c.l.b16 %v383
    %v1408 = vunpack.c.l.b16 %v384
    %v1409 = vunpack.c.l.b16 %v385
    %v1410 = vunpack.c.l.b16 %v386
    %v1411 = vunpack.c.l.b16 %v387
    %v1412 = vunpack.c.l.b16 %v388
    %v1413 = vunpack.c.l.b16 %v389
    %v1414 = vunpack.c.l.b16 %v390
    %v1415 = vunpack.c.l.b16 %v391
    %v1416 = vunpack.c.l.b16 %v392
    %v1417 = vunpack.c.l.b16 %v393
    %v1418 = vunpack.c.l.b16 %v394
    %v1419 = vunpack.c.l.b16 %v395
    %v1420 = vunpack.c.l.b16 %v396
    %v1421 = vunpack.c.l.b16 %v397
    %v1422 = vunpack.c.l.b16 %v398
    %v1423 = vunpack.c.l.b16 %v399
    %v1424 = vunpack.c.l.b16 %v400
    %v1425 = vunpack.c.l.b16 %v401
    %v1426 = vunpack.c.l.b16 %v402
    %v1427 = vunpack.c.l.b16 %v403
    %v1428 = vunpack.c.l.b16 %v404
    %v1429 = vunpack.c.l.b16 %v405
    %v1430 = vunpack.c.l.b16 %v406
    %v1431 = vunpack.c.l.b16 %v407
    %v1432 = vunpack.c.l.b16 %v408
    %v1433 = vunpack.c.l.b16 %v409
    %v1434 = vunpack.c.l.b16 %v410
    %v1435 = vunpack.c.l.b16 %v411
    %v1436 = vunpack.c.l.b16 %v412
    %v1437 = vunpack.c.l.b16 %v413
    %v1438 = vunpack.c.l.b16 %v414
    %v1439 = vunpack.c.l.b16 %v415
    %v1440 = vunpack.c.l.b16 %v416
    %v1441 = vunpack.c.l.b16 %v417
    %v1442 = vunpack.c.l.b16 %v418
    %v1443 = vunpack.c.l.b16 %v419
    %v1444 = vunpack.c.l.b16 %v420
    %v1445 = vunpack.c.l.b16 %v421
    %v1446 = vunpack.c.l.b16 %v422
    %v1447 = vunpack.c.l.b16 %v423
    %v1448 = vunpack.c.l.b16 %v424
    %v1449 = vunpack.c.l.b16 %v425
    %v1450 = vunpack.c.l.b16 %v426
    %v1451 = vunpack.c.l.b16 %v427
    %v1452 = vunpack.c.l.b16 %v428
    %v1453 = vunpack.c.l.b16 %v429
    %v1454 = vunpack.c.l.b16 %v430
    %v1455 = vunpack.c.l.b16 %v431
    %v1456 = vunpack.c.l.b16 %v432
    %v1457 = vunpack.c.l.b16 %v433
    %v1458 = vunpack.c.l.b16 %v434
    %v1459 = vunpack.c.l.b16 %v435
    %v1460 = vunpack.c.l.b16 %v436
    %v1461 = vunpack.c.l.b16 %v437
    %v1462 = vunpack.c.l.b16 %v438
    %v1463 = vunpack.c.l.b16 %v439
    %v1464 = vunpack.c.l.b16 %v440
    %v1465 = vunpack.c.l.b16 %v441
    %v1466 = vunpack.c.l.b16 %v442
    %v1467 = vunpack.c.l.b16 %v443
    %v1468 = vunpack.c.l.b16 %v444
    %v1469 = vunpack.c.l.b16 %v445
    %v1470 = vunpack.c.l.b16 %v446
    %v1471 = vunpack.c.l.b16 %v447
    %v1472 = vunpack.c.l.b16 %v448
    %v1473 = vunpack.c.l.b16 %v449
    %v1474 = vunpack.c.l.b16 %v450
    %v1475 = vunpack.c.l.b16 %v451
    %v1476 = vunpack.c.l.b16 %v452
    %v1477 = vunpack.c.l.b16 %v453
    %v1478 = vunpack.c.l.b16 %v454
    %v1479 = vunpack.c.l.b16 %v455
    %v1480 = vunpack.c.l.b16 %v456
    %v1481 = vunpack.c.l.b16 %v457
    %v1482 = vunpack.c.l.b16 %v458
    %v1483 = vunpack.c.l.b16 %v459
    %v1484 = vunpack.c.l.b16 %v460
    %v1485 = vunpack.c.l.b16 %v461
    %v1486 = vunpack.c.l.b16 %v462
    %v1487 = vunpack.c.l.b16 %v463
    %v1488 = vunpack.c.l.b16 %v464
    %v1489 = vunpack.c.l.b16 %v465
    %v1490 = vunpack.c.l.b16 %v466
    %v1491 = vunpack.c.l.b16 %v467
    %v1492 = vunpack.c.l.b16 %v468
    %v1493 = vunpack.c.l.b16 %v469
    %v1494 = vunpack.c.l.b16 %v470
    %v1495 = vunpack.c.l.b16 %v471
    %v1496 = vunpack.c.l.b16 %v472
    %v1497 = vunpack.c.l.b16 %v473
    %v1498 = vunpack.c.l.b16 %v474
    %v1499 = vunpack.c.l.b16 %v475
    %v1500 = vunpack.c.l.b16 %v476
    %v1501 = vunpack.c.l.b16 %v477
    %v1502 = vunpack.c.l.b16 %v478
    %v1503 = vunpack.c.l.b16 %v479
    %v1504 = vunpack.c.l.b16 %v480
    %v1505 = vunpack.c.l.b16 %v481
    %v1506 = vunpack.c.l.b16 %v482
    %v1507 = vunpack.c.l.b16 %v483
    %v1508 = vunpack.c.l.b16 %v484
    %v1509 = vunpack.c.l.b16 %v485
    %v1510 = vunpack.c.l.b16 %v486
    %v1511 = vunpack.c.l.b16 %v487
    %v1512 = vunpack.c.l.b16 %v488
    %v1513 = vunpack.c.l.b16 %v489
    %v1514 = vunpack.c.l.b16 %v490
    %v1515 = vunpack.c.l.b16 %v491
    %v1516 = vunpack.c.l.b16 %v492
    %v1517 = vunpack.c.l.b16 %v493
    %v1518 = vunpack.c.l.b16 %v494
    %v1519 = vunpack.c.l.b16 %v495
    %v1520 = vunpack.c.l.b16 %v496
    %v1521 = vunpack.c.l.b16 %v497
    %v1522 = vunpack.c.l.b16 %v498
    %v1523 = vunpack.c.l.b16 %v499
    %v1524 = vunpack.c.l.b16 %v500
    %v1525 = vunpack.c.l.b16 %v501
    %v1526 = vunpack.c.l.b16 %v502
    %v1527 = vunpack.c.l.b16 %v503
    %v1528 = vunpack.c.l.b16 %v504
    %v1529 = vunpack.c.l.b16 %v505
    %v1530 = vunpack.c.l.b16 %v506
    %v1531 = vunpack.c.l.b16 %v507
    %v1532 = vunpack.c.l.b16 %v508
    %v1533 = vunpack.c.l.b16 %v509
    %v1534 = vunpack.c.l.b16 %v510
    %v1535 = vunpack.c.l.b16 %v511
    %v1536 = vunpack.c.l.b16 %v512
    %v1537 = vunpack.c.l.b16 %v513
    %v1538 = vunpack.c.l.b16 %v514
    %v1539 = vunpack.c.l.b16 %v515
    %v1540 = vunpack.c.l.b16 %v516
    %v1541 = vunpack.c.l.b16 %v517
    %v1542 = vunpack.c.l.b16 %v518
    %v1543 = vunpack.c.l.b16 %v519
    %v1544 = vunpack.c.l.b16 %v520
    %v1545 = vunpack.c.l.b16 %v521
    %v1546 = vunpack.c.l.b16 %v522
    %v1547 = vunpack.c.l.b16 %v523
    %v1548 = vunpack.c.l.b16 %v524
    %v1549 = vunpack.c.l.b16 %v525
    %v1550 = vunpack.c.l.b16 %v526
    %v1551 = vunpack.c.l.b16 %v527
    %v1552 = vunpack.c.l.b16 %v528
    %v1553 = vunpack.c.l.b16 %v529
    %v1554 = vunpack.c.l.b16 %v530
    %v1555 = vunpack.c.l.b16 %v531
    %v1556 = vunpack.c.l.b16 %v532
    %v1557 = vunpack.c.l.b16 %v533
    %v1558 = vunpack.c.l.b16 %v534
    %v1559 = vunpack.c.l.b16 %v535
    %v1560 = vunpack.c.l.b16 %v536
    %v1561 = vunpack.c.l.b16 %v537
    %v1562 = vunpack.c.l.b16 %v538
    %v1563 = vunpack.c.l.b16 %v539
    %v1564 = vunpack.c.l.b16 %v540
    %v1565 = vunpack.c.l.b16 %v541
    %v1566 = vunpack.c.l.b16 %v542
    %v1567 = vunpack.c.l.b16 %v543
    %v1568 = vunpack.c.l.b16 %v544
    %v1569 = vunpack.c.l.b16 %v545
    %v1570 = vunpack.c.l.b16 %v546
    %v1571 = vunpack.c.l.b16 %v547
    %v1572 = vunpack.c.l.b16 %v548
    %v1573 = vunpack.c.l.b16 %v549
    %v1574 = vunpack.c.l.b16 %v550
    %v1575 = vunpack.c.l.b16 %v551
    %v1576 = vunpack.c.l.b16 %v552
    %v1577 = vunpack.c.l.b16 %v553
    %v1578 = vunpack.c.l.b16 %v554
    %v1579 = vunpack.c.l.b16 %v555
    %v1580 = vunpack.c.l.b16 %v556
    %v1581 = vunpack.c.l.b16 %v557
    %v1582 = vunpack.c.l.b16 %v558
    %v1583 = vunpack.c.l.b16 %v559
    %v1584 = vunpack.c.l.b16 %v560
    %v1585 = vunpack.c.l.b16 %v561
    %v1586 = vunpack.c.l.b16 %v562
    %v1587 = vunpack.c.l.b16 %v563
    %v1588 = vunpack.c.l.b16 %v564
    %v1589 = vunpack.c.l.b16 %v565
    %v1590 = vunpack.c.l.b16 %v566
    %v1591 = vunpack.c.l.b16 %v567
    %v1592 = vunpack.c.l.b16 %v568
    %v1593 = vunpack.c.l.b16 %v569
    %v1594 = vunpack.c.l.b16 %v570
    %v1595 = vunpack.c.l.b16 %v571
    %v1596 = vunpack.c.l.b16 %v572
    %v1597 = vunpack.c.l.b16 %v573
    %v1598 = vunpack.c.l.b16 %v574
    %v1599 = vunpack.c.l.b16 %v575
    %v1600 = vunpack.c.l.b16 %v576
    %v1601 = vunpack.c.l.b16 %v577
    %v1602 = vunpack.c.l.b16 %v578
    %v1603 = vunpack.c.l.b16 %v579
    %v1604 = vunpack.c.l.b16 %v580
    %v1605 = vunpack.c.l.b16 %v581
    %v1606 = vunpack.c.l.b16 %v582
    %v1607 = vunpack.c.l.b16 %v583
    %v1608 = vunpack.c.l.b16 %v584
    %v1609 = vunpack.c.l.b16 %v585
    %v1610 = vunpack.c.l.b16 %v586
    %v1611 = vunpack.c.l.b16 %v587
    %v1612 = vunpack.c.l.b16 %v588
    %v1613 = vunpack.c.l.b16 %v589
    %v1614 = vunpack.c.l.b16 %v590
    %v1615 = vunpack.c.l.b16 %v591
    %v1616 = vunpack.c.l.b16 %v592
    %v1617 = vunpack.c.l.b16 %v593
    %v1618 = vunpack.c.l.b16 %v594
    %v1619 = vunpack.c.l.b16 %v595
    %v1620 = vunpack.c.l.b16 %v596
    %v1621 = vunpack.c.l.b16 %v597
    %v1622 = vunpack.c.l.b16 %v598
    %v1623 = vunpack.c.l.b16 %v599
    %v1624 = vunpack.c.l.b16 %v600
    %v1625 = vunpack.c.l.b16 %v601
    %v1626 = vunpack.c.l.b16 %v602
    %v1627 = vunpack.c.l.b16 %v603
    %v1628 = vunpack.c.l.b16 %v604
    %v1629 = vunpack.c.l.b16 %v605
    %v1630 = vunpack.c.l.b16 %v606
    %v1631 = vunpack.c.l.b16 %v607
    %v1632 = vunpack.c.l.b16 %v608
    %v1633 = vunpack.c.l.b16 %v609
    %v1634 = vunpack.c.l.b16 %v610
    %v1635 = vunpack.c.l.b16 %v611
    %v1636 = vunpack.c.l.b16 %v612
    %v1637 = vunpack.c.l.b16 %v613
    %v1638 = vunpack.c.l.b16 %v614
    %v1639 = vunpack.c.l.b16 %v615
    %v1640 = vunpack.c.l.b16 %v616
    %v1641 = vunpack.c.l.b16 %v617
    %v1642 = vunpack.c.l.b16 %v618
    %v1643 = vunpack.c.l.b16 %v619
    %v1644 = vunpack.c.l.b16 %v620
    %v1645 = vunpack.c.l.b16 %v621
    %v1646 = vunpack.c.l.b16 %v622
    %v1647 = vunpack.c.l.b16 %v623
    %v1648 = vunpack.c.l.b16 %v624
    %v1649 = vunpack.c.l.b16 %v625
    %v1650 = vunpack.c.l.b16 %v626
    %v1651 = vunpack.c.l.b16 %v627
    %v1652 = vunpack.c.l.b16 %v628
    %v1653 = vunpack.c.l.b16 %v629
    %v1654 = vunpack.c.l.b16 %v630
    %v1655 = vunpack.c.l.b16 %v631
    %v1656 = vunpack.c.l.b16 %v632
    %v1657 = vunpack.c.l.b16 %v633
    %v1658 = vunpack.c.l.b16 %v634
    %v1659 = vunpack.c.l.b16 %v635
    %v1660 = vunpack.c.l.b16 %v636
    %v1661 = vunpack.c.l.b16 %v637
    %v1662 = vunpack.c.l.b16 %v638
    %v1663 = vunpack.c.l.b16 %v639
    %v1664 = vunpack.c.l.b16 %v640
    %v1665 = vunpack.c.l.b16 %v641
    %v1666 = vunpack.c.l.b16 %v642
    %v1667 = vunpack.c.l.b16 %v643
    %v1668 = vunpack.c.l.b16 %v644
    %v1669 = vunpack.c.l.b16 %v645
    %v1670 = vunpack.c.l.b16 %v646
    %v1671 = vunpack.c.l.b16 %v647
    %v1672 = vunpack.c.l.b16 %v648
    %v1673 = vunpack.c.l.b16 %v649
    %v1674 = vunpack.c.l.b16 %v650
    %v1675 = vunpack.c.l.b16 %v651
    %v1676 = vpack.c.b16 %v1165, %v1164
    %v1677 = vpack.c.b16 %v1167, %v1166
    %v1678 = vpack.c.b16 %v1169, %v1168
    %v1679 = vpack.c.b16 %v1171, %v1170
    %v1680 = vpack.c.b16 %v1173, %v1172
    %v1681 = vpack.c.b16 %v1175, %v1174
    %v1682 = vpack.c.b16 %v1177, %v1176
    %v1683 = vpack.c.b16 %v1179, %v1178
    %v1684 = vpack.c.b16 %v1181, %v1180
    %v1685 = vpack.c.b16 %v1183, %v1182
    %v1686 = vpack.c.b16 %v1185, %v1184
    %v1687 = vpack.c.b16 %v1187, %v1186
    %v1688 = vpack.c.b16 %v1189, %v1188
    %v1689 = vpack.c.b16 %v1191, %v1190
    %v1690 = vpack.c.b16 %v1193, %v1192
    %v1691 = vpack.c.b16 %v1195, %v1194
    %v1692 = vpack.c.b16 %v1197, %v1196
    %v1693 = vpack.c.b16 %v1199, %v1198
    %v1694 = vpack.c.b16 %v1201, %v1200
    %v1695 = vpack.c.b16 %v1203, %v1202
    %v1696 = vpack.c.b16 %v1205, %v1204
    %v1697 = vpack.c.b16 %v1207, %v1206
    %v1698 = vpack.c.b16 %v1209, %v1208
    %v1699 = vpack.c.b16 %v1211, %v1210
    %v1700 = vpack.c.b16 %v1213, %v1212
    %v1701 = vpack.c.b16 %v1215, %v1214
    %v1702 = vpack.c.b16 %v1217, %v1216
    %v1703 = vpack.c.b16 %v1219, %v1218
    %v1704 = vpack.c.b16 %v1221, %v1220
    %v1705 = vpack.c.b16 %v1223, %v1222
    %v1706 = vpack.c.b16 %v1225, %v1224
    %v1707 = vpack.c.b16 %v1227, %v1226
    %v1708 = vpack.c.b16 %v1229, %v1228
    %v1709 = vpack.c.b16 %v1231, %v1230
    %v1710 = vpack.c.b16 %v1233, %v1232
    %v1711 = vpack.c.b16 %v1235, %v1234
    %v1712 = vpack.c.b16 %v1237, %v1236
    %v1713 = vpack.c.b16 %v1239, %v1238
    %v1714 = vpack.c.b16 %v1241, %v1240
    %v1715 = vpack.c.b16 %v1243, %v1242
    %v1716 = vpack.c.b16 %v1245, %v1244
    %v1717 = vpack.c.b16 %v1247, %v1246
    %v1718 = vpack.c.b16 %v1249, %v1248
    %v1719 = vpack.c.b16 %v1251, %v1250
    %v1720 = vpack.c.b16 %v1253, %v1252
    %v1721 = vpack.c.b16 %v1255, %v1254
    %v1722 = vpack.c.b16 %v1257, %v1256
    %v1723 = vpack.c.b16 %v1259, %v1258
    %v1724 = vpack.c.b16 %v1261, %v1260
    %v1725 = vpack.c.b16 %v1263, %v1262
    %v1726 = vpack.c.b16 %v1265, %v1264
    %v1727 = vpack.c.b16 %v1267, %v1266
    %v1728 = vpack.c.b16 %v1269, %v1268
    %v1729 = vpack.c.b16 %v1271, %v1270
    %v1730 = vpack.c.b16 %v1273, %v1272
    %v1731 = vpack.c.b16 %v1275, %v1274
    %v1732 = vpack.c.b16 %v1277, %v1276
    %v1733 = vpack.c.b16 %v1279, %v1278
    %v1734 = vpack.c.b16 %v1281, %v1280
    %v1735 = vpack.c.b16 %v1283, %v1282
    %v1736 = vpack.c.b16 %v1285, %v1284
    %v1737 = vpack.c.b16 %v1287, %v1286
    %v1738 = vpack.c.b16 %v1289, %v1288
    %v1739 = vpack.c.b16 %v1291, %v1290
    %v1740 = vpack.c.b16 %v1293, %v1292
    %v1741 = vpack.c.b16 %v1295, %v1294
    %v1742 = vpack.c.b16 %v1297, %v1296
    %v1743 = vpack.c.b16 %v1299, %v1298
    %v1744 = vpack.c.b16 %v1301, %v1300
    %v1745 = vpack.c.b16 %v1303, %v1302
    %v1746 = vpack.c.b16 %v1305, %v1304
    %v1747 = vpack.c.b16 %v1307, %v1306
    %v1748 = vpack.c.b16 %v1309, %v1308
    %v1749 = vpack.c.b16 %v1311, %v1310
    %v1750 = vpack.c.b16 %v1313, %v1312
    %v1751 = vpack.c.b16 %v1315, %v1314
    %v1752 = vpack.c.b16 %v1317, %v1316
    %v1753 = vpack.c.b16 %v1319, %v1318
    %v1754 = vpack.c.b16 %v1321, %v1320
    %v1755 = vpack.c.b16 %v1323, %v1322
    %v1756 = vpack.c.b16 %v1325, %v1324
    %v1757 = vpack.c.b16 %v1327, %v1326
    %v1758 = vpack.c.b16 %v1329, %v1328
    %v1759 = vpack.c.b16 %v1331, %v1330
    %v1760 = vpack.c.b16 %v1333, %v1332
    %v1761 = vpack.c.b16 %v1335, %v1334
    %v1762 = vpack.c.b16 %v1337, %v1336
    %v1763 = vpack.c.b16 %v1339, %v1338
    %v1764 = vpack.c.b16 %v1341, %v1340
    %v1765 = vpack.c.b16 %v1343, %v1342
    %v1766 = vpack.c.b16 %v1345, %v1344
    %v1767 = vpack.c.b16 %v1347, %v1346
    %v1768 = vpack.c.b16 %v1349, %v1348
    %v1769 = vpack.c.b16 %v1351, %v1350
    %v1770 = vpack.c.b16 %v1353, %v1352
    %v1771 = vpack.c.b16 %v1355, %v1354
    %v1772 = vpack.c.b16 %v1357, %v1356
    %v1773 = vpack.c.b16 %v1359, %v1358
    %v1774 = vpack.c.b16 %v1361, %v1360
    %v1775 = vpack.c.b16 %v1363, %v1362
    %v1776 = vpack.c.b16 %v1365, %v1364
    %v1777 = vpack.c.b16 %v1367, %v1366
    %v1778 = vpack.c.b16 %v1369, %v1368
    %v1779 = vpack.c.b16 %v1371, %v1370
    %v1780 = vpack.c.b16 %v1373, %v1372
    %v1781 = vpack.c.b16 %v1375, %v1374
    %v1782 = vpack.c.b16 %v1377, %v1376
    %v1783 = vpack.c.b16 %v1379, %v1378
    %v1784 = vpack.c.b16 %v1381, %v1380
    %v1785 = vpack.c.b16 %v1383, %v1382
    %v1786 = vpack.c.b16 %v1385, %v1384
    %v1787 = vpack.c.b16 %v1387, %v1386
    %v1788 = vpack.c.b16 %v1389, %v1388
    %v1789 = vpack.c.b16 %v1391, %v1390
    %v1790 = vpack.c.b16 %v1393, %v1392
    %v1791 = vpack.c.b16 %v1395, %v1394
    %v1792 = vpack.c.b16 %v1397, %v1396
    %v1793 = vpack.c.b16 %v1399, %v1398
    %v1794 = vpack.c.b16 %v1401, %v1400
    %v1795 = vpack.c.b16 %v1403, %v1402
    %v1796 = vpack.c.b16 %v1405, %v1404
    %v1797 = vpack.c.b16 %v1407, %v1406
    %v1798 = vpack.c.b16 %v1409, %v1408
    %v1799 = vpack.c.b16 %v1411, %v1410
    %v1800 = vpack.c.b16 %v1413, %v1412
    %v1801 = vpack.c.b16 %v1415, %v1414
    %v1802 = vpack.c.b16 %v1417, %v1416
    %v1803 = vpack.c.b16 %v1419, %v1418
    %v1804 = vpack.c.b16 %v1421, %v1420
    %v1805 = vpack.c.b16 %v1423, %v1422
    %v1806 = vpack.c.b16 %v1425, %v1424
    %v1807 = vpack.c.b16 %v1427, %v1426
    %v1808 = vpack.c.b16 %v1429, %v1428
    %v1809 = vpack.c.b16 %v1431, %v1430
    %v1810 = vpack.c.b16 %v1433, %v1432
    %v1811 = vpack.c.b16 %v1435, %v1434
    %v1812 = vpack.c.b16 %v1437, %v1436
    %v1813 = vpack.c.b16 %v1439, %v1438
    %v1814 = vpack.c.b16 %v1441, %v1440
    %v1815 = vpack.c.b16 %v1443, %v1442
    %v1816 = vpack.c.b16 %v1445, %v1444
    %v1817 = vpack.c.b16 %v1447, %v1446
    %v1818 = vpack.c.b16 %v1449, %v1448
    %v1819 = vpack.c.b16 %v1451, %v1450
    %v1820 = vpack.c.b16 %v1453, %v1452
    %v1821 = vpack.c.b16 %v1455, %v1454
    %v1822 = vpack.c.b16 %v1457, %v1456
    %v1823 = vpack.c.b16 %v1459, %v1458
    %v1824 = vpack.c.b16 %v1461, %v1460
    %v1825 = vpack.c.b16 %v1463, %v1462
    %v1826 = vpack.c.b16 %v1465, %v1464
    %v1827 = vpack.c.b16 %v1467, %v1466
    %v1828 = vpack.c.b16 %v1469, %v1468
    %v1829 = vpack.c.b16 %v1471, %v1470
    %v1830 = vpack.c.b16 %v1473, %v1472
    %v1831 = vpack.c.b16 %v1475, %v1474
    %v1832 = vpack.c.b16 %v1477, %v1476
    %v1833 = vpack.c.b16 %v1479, %v1478
    %v1834 = vpack.c.b16 %v1481, %v1480
    %v1835 = vpack.c.b16 %v1483, %v1482
    %v1836 = vpack.c.b16 %v1485, %v1484
    %v1837 = vpack.c.b16 %v1487, %v1486
    %v1838 = vpack.c.b16 %v1489, %v1488
    %v1839 = vpack.c.b16 %v1491, %v1490
    %v1840 = vpack.c.b16 %v1493, %v1492
    %v1841 = vpack.c.b16 %v1495, %v1494
    %v1842 = vpack.c.b16 %v1497, %v1496
    %v1843 = vpack.c.b16 %v1499, %v1498
    %v1844 = vpack.c.b16 %v1501, %v1500
    %v1845 = vpack.c.b16 %v1503, %v1502
    %v1846 = vpack.c.b16 %v1505, %v1504
    %v1847 = vpack.c.b16 %v1507, %v1506
    %v1848 = vpack.c.b16 %v1509, %v1508
    %v1849 = vpack.c.b16 %v1511, %v1510
    %v1850 = vpack.c.b16 %v1513, %v1512
    %v1851 = vpack.c.b16 %v1515, %v1514
    %v1852 = vpack.c.b16 %v1517, %v1516
    %v1853 = vpack.c.b16 %v1519, %v1518
    %v1854 = vpack.c.b16 %v1521, %v1520
    %v1855 = vpack.c.b16 %v1523, %v1522
    %v1856 = vpack.c.b16 %v1525, %v1524
    %v1857 = vpack.c.b16 %v1527, %v1526
    %v1858 = vpack.c.b16 %v1529, %v1528
    %v1859 = vpack.c.b16 %v1531, %v1530
    %v1860 = vpack.c.b16 %v1533, %v1532
    %v1861 = vpack.c.b16 %v1535, %v1534
    %v1862 = vpack.c.b16 %v1537, %v1536
    %v1863 = vpack.c.b16 %v1539, %v1538
    %v1864 = vpack.c.b16 %v1541, %v1540
    %v1865 = vpack.c.b16 %v1543, %v1542
    %v1866 = vpack.c.b16 %v1545, %v1544
    %v1867 = vpack.c.b16 %v1547, %v1546
    %v1868 = vpack.c.b16 %v1549, %v1548
    %v1869 = vpack.c.b16 %v1551, %v1550
    %v1870 = vpack.c.b16 %v1553, %v1552
    %v1871 = vpack.c.b16 %v1555, %v1554
    %v1872 = vpack.c.b16 %v1557, %v1556
    %v1873 = vpack.c.b16 %v1559, %v1558
    %v1874 = vpack.c.b16 %v1561, %v1560
    %v1875 = vpack.c.b16 %v1563, %v1562
    %v1876 = vpack.c.b16 %v1565, %v1564
    %v1877 = vpack.c.b16 %v1567, %v1566
    %v1878 = vpack.c.b16 %v1569, %v1568
    %v1879 = vpack.c.b16 %v1571, %v1570
    %v1880 = vpack.c.b16 %v1573, %v1572
    %v1881 = vpack.c.b16 %v1575, %v1574
    %v1882 = vpack.c.b16 %v1577, %v1576
    %v1883 = vpack.c.b16 %v1579, %v1578
    %v1884 = vpack.c.b16 %v1581, %v1580
    %v1885 = vpack.c.b16 %v1583, %v1582
    %v1886 = vpack.c.b16 %v1585, %v1584
    %v1887 = vpack.c.b16 %v1587, %v1586
    %v1888 = vpack.c.b16 %v1589, %v1588
    %v1889 = vpack.c.b16 %v1591, %v1590
    %v1890 = vpack.c.b16 %v1593, %v1592
    %v1891 = vpack.c.b16 %v1595, %v1594
    %v1892 = vpack.c.b16 %v1597, %v1596
    %v1893 = vpack.c.b16 %v1599, %v1598
    %v1894 = vpack.c.b16 %v1601, %v1600
    %v1895 = vpack.c.b16 %v1603, %v1602
    %v1896 = vpack.c.b16 %v1605, %v1604
    %v1897 = vpack.c.b16 %v1607, %v1606
    %v1898 = vpack.c.b16 %v1609, %v1608
    %v1899 = vpack.c.b16 %v1611, %v1610
    %v1900 = vpack.c.b16 %v1613, %v1612
    %v1901 = vpack.c.b16 %v1615, %v1614
    %v1902 = vpack.c.b16 %v1617, %v1616
    %v1903 = vpack.c.b16 %v1619, %v1618
    %v1904 = vpack.c.b16 %v1621, %v1620
    %v1905 = vpack.c.b16 %v1623, %v1622
    %v1906 = vpack.c.b16 %v1625, %v1624
    %v1907 = vpack.c.b16 %v1627, %v1626
    %v1908 = vpack.c.b16 %v1629, %v1628
    %v1909 = vpack.c.b16 %v1631, %v1630
    %v1910 = vpack.c.b16 %v1633, %v1632
    %v1911 = vpack.c.b16 %v1635, %v1634
    %v1912 = vpack.c.b16 %v1637, %v1636
    %v1913 = vpack.c.b16 %v1639, %v1638
    %v1914 = vpack.c.b16 %v1641, %v1640
    %v1915 = vpack.c.b16 %v1643, %v1642
    %v1916 = vpack.c.b16 %v1645, %v1644
    %v1917 = vpack.c.b16 %v1647, %v1646
    %v1918 = vpack.c.b16 %v1649, %v1648
    %v1919 = vpack.c.b16 %v1651, %v1650
    %v1920 = vpack.c.b16 %v1653, %v1652
    %v1921 = vpack.c.b16 %v1655, %v1654
    %v1922 = vpack.c.b16 %v1657, %v1656
    %v1923 = vpack.c.b16 %v1659, %v1658
    %v1924 = vpack.c.b16 %v1661, %v1660
    %v1925 = vpack.c.b16 %v1663, %v1662
    %v1926 = vpack.c.b16 %v1665, %v1664
    %v1927 = vpack.c.b16 %v1667, %v1666
    %v1928 = vpack.c.b16 %v1669, %v1668
    %v1929 = vpack.c.b16 %v1671, %v1670
    %v1930 = vpack.c.b16 %v1673, %v1672
    %v1931 = vpack.c.b16 %v1675, %v1674
    %2188 = vmatpush.bf16.msra.mxu0 %v1683
    %2189 = vmatpush.bf16.msra.mxu0 %v1682
    %2190 = vmatpush.bf16.msra.mxu0 %v1681
    %2191 = vmatpush.bf16.msra.mxu0 %v1680
    %2192 = vmatpush.bf16.msra.mxu0 %v1679
    %2193 = vmatpush.bf16.msra.mxu0 %v1678
    %2194 = vmatpush.bf16.msra.mxu0 %v1677
    %2195 = vmatpush.bf16.msra.mxu0 %v1676
    %2196 = vmatmul.bf16.gmra.mxu0 %v108
    %v2197 = vpop.f32.mrf.mxu0
    %v2198 = vadd.f32 0.0, %v2197
    %v2199 = vpop.f32.mrf.mxu0
    %2200 = vdwg.mxu0
    %2201 = vmatpush.bf16.msra.mxu0 %v1691
    %2202 = vmatpush.bf16.msra.mxu0 %v1690
    %2203 = vmatpush.bf16.msra.mxu0 %v1689
    %2204 = vmatpush.bf16.msra.mxu0 %v1688
    %2205 = vmatpush.bf16.msra.mxu0 %v1687
    %2206 = vmatpush.bf16.msra.mxu0 %v1686
    %2207 = vmatpush.bf16.msra.mxu0 %v1685
    %2208 = vmatpush.bf16.msra.mxu0 %v1684
    %2209 = vmatmul.bf16.gmra.mxu0 %v109
    %v2210 = vpop.f32.mrf.mxu0
    %v2211 = vadd.f32 %v2198, %v2210
    %v2212 = vpop.f32.mrf.mxu0
    %2213 = vdwg.mxu0
    %2214 = vmatpush.bf16.msra.mxu0 %v1699
    %2215 = vmatpush.bf16.msra.mxu0 %v1698
    %2216 = vmatpush.bf16.msra.mxu0 %v1697
    %2217 = vmatpush.bf16.msra.mxu0 %v1696
    %2218 = vmatpush.bf16.msra.mxu0 %v1695
    %2219 = vmatpush.bf16.msra.mxu0 %v1694
    %2220 = vmatpush.bf16.msra.mxu0 %v1693
    %2221 = vmatpush.bf16.msra.mxu0 %v1692
    %2222 = vmatmul.bf16.gmra.mxu0 %v110
    %v2223 = vpop.f32.mrf.mxu0
    %v2224 = vadd.f32 %v2211, %v2223
    %v2225 = vpop.f32.mrf.mxu0
    %2226 = vdwg.mxu0
    %2227 = vmatpush.bf16.msra.mxu0 %v1707
    %2228 = vmatpush.bf16.msra.mxu0 %v1706
    %2229 = vmatpush.bf16.msra.mxu0 %v1705
    %2230 = vmatpush.bf16.msra.mxu0 %v1704
    %2231 = vmatpush.bf16.msra.mxu0 %v1703
    %2232 = vmatpush.bf16.msra.mxu0 %v1702
    %2233 = vmatpush.bf16.msra.mxu0 %v1701
    %2234 = vmatpush.bf16.msra.mxu0 %v1700
    %2235 = vmatmul.bf16.gmra.mxu0 %v111
    %v2236 = vpop.f32.mrf.mxu0
    %v2237 = vadd.f32 %v2224, %v2236
    %v2238 = vpop.f32.mrf.mxu0
    %2239 = vdwg.mxu0
    %2240 = vmatpush.bf16.msra.mxu0 %v1715
    %2241 = vmatpush.bf16.msra.mxu0 %v1714
    %2242 = vmatpush.bf16.msra.mxu0 %v1713
    %2243 = vmatpush.bf16.msra.mxu0 %v1712
    %2244 = vmatpush.bf16.msra.mxu0 %v1711
    %2245 = vmatpush.bf16.msra.mxu0 %v1710
    %2246 = vmatpush.bf16.msra.mxu0 %v1709
    %2247 = vmatpush.bf16.msra.mxu0 %v1708
    %2248 = vmatmul.bf16.gmra.mxu0 %v112
    %v2249 = vpop.f32.mrf.mxu0
    %v2250 = vadd.f32 %v2237, %v2249
    %v2251 = vpop.f32.mrf.mxu0
    %2252 = vdwg.mxu0
    %2253 = vmatpush.bf16.msra.mxu0 %v1723
    %2254 = vmatpush.bf16.msra.mxu0 %v1722
    %2255 = vmatpush.bf16.msra.mxu0 %v1721
    %2256 = vmatpush.bf16.msra.mxu0 %v1720
    %2257 = vmatpush.bf16.msra.mxu0 %v1719
    %2258 = vmatpush.bf16.msra.mxu0 %v1718
    %2259 = vmatpush.bf16.msra.mxu0 %v1717
    %2260 = vmatpush.bf16.msra.mxu0 %v1716
    %2261 = vmatmul.bf16.gmra.mxu0 %v113
    %v2262 = vpop.f32.mrf.mxu0
    %v2263 = vadd.f32 %v2250, %v2262
    %v2264 = vpop.f32.mrf.mxu0
    %2265 = vdwg.mxu0
    %2266 = vmatpush.bf16.msra.mxu0 %v1731
    %2267 = vmatpush.bf16.msra.mxu0 %v1730
    %2268 = vmatpush.bf16.msra.mxu0 %v1729
    %2269 = vmatpush.bf16.msra.mxu0 %v1728
    %2270 = vmatpush.bf16.msra.mxu0 %v1727
    %2271 = vmatpush.bf16.msra.mxu0 %v1726
    %2272 = vmatpush.bf16.msra.mxu0 %v1725
    %2273 = vmatpush.bf16.msra.mxu0 %v1724
    %2274 = vmatmul.bf16.gmra.mxu0 %v114
    %v2275 = vpop.f32.mrf.mxu0
    %v2276 = vadd.f32 %v2263, %v2275
    %v2277 = vpop.f32.mrf.mxu0
    %2278 = vdwg.mxu0
    %2279 = vmatpush.bf16.msra.mxu0 %v1739
    %2280 = vmatpush.bf16.msra.mxu0 %v1738
    %2281 = vmatpush.bf16.msra.mxu0 %v1737
    %2282 = vmatpush.bf16.msra.mxu0 %v1736
    %2283 = vmatpush.bf16.msra.mxu0 %v1735
    %2284 = vmatpush.bf16.msra.mxu0 %v1734
    %2285 = vmatpush.bf16.msra.mxu0 %v1733
    %2286 = vmatpush.bf16.msra.mxu0 %v1732
    %2287 = vmatmul.bf16.gmra.mxu0 %v115
    %v2288 = vpop.f32.mrf.mxu0
    %v2289 = vadd.f32 %v2276, %v2288
    %v2290 = vpop.f32.mrf.mxu0
    %2291 = vdwg.mxu0
    %2292 = vmatpush.bf16.msra.mxu0 %v1747
    %2293 = vmatpush.bf16.msra.mxu0 %v1746
    %2294 = vmatpush.bf16.msra.mxu0 %v1745
    %2295 = vmatpush.bf16.msra.mxu0 %v1744
    %2296 = vmatpush.bf16.msra.mxu0 %v1743
    %2297 = vmatpush.bf16.msra.mxu0 %v1742
    %2298 = vmatpush.bf16.msra.mxu0 %v1741
    %2299 = vmatpush.bf16.msra.mxu0 %v1740
    %2300 = vmatmul.bf16.gmra.mxu0 %v116
    %v2301 = vpop.f32.mrf.mxu0
    %v2302 = vadd.f32 %v2289, %v2301
    %v2303 = vpop.f32.mrf.mxu0
    %2304 = vdwg.mxu0
    %2305 = vmatpush.bf16.msra.mxu0 %v1755
    %2306 = vmatpush.bf16.msra.mxu0 %v1754
    %2307 = vmatpush.bf16.msra.mxu0 %v1753
    %2308 = vmatpush.bf16.msra.mxu0 %v1752
    %2309 = vmatpush.bf16.msra.mxu0 %v1751
    %2310 = vmatpush.bf16.msra.mxu0 %v1750
    %2311 = vmatpush.bf16.msra.mxu0 %v1749
    %2312 = vmatpush.bf16.msra.mxu0 %v1748
    %2313 = vmatmul.bf16.gmra.mxu0 %v117
    %v2314 = vpop.f32.mrf.mxu0
    %v2315 = vadd.f32 %v2302, %v2314
    %v2316 = vpop.f32.mrf.mxu0
    %2317 = vdwg.mxu0
    %2318 = vmatpush.bf16.msra.mxu0 %v1763
    %2319 = vmatpush.bf16.msra.mxu0 %v1762
    %2320 = vmatpush.bf16.msra.mxu0 %v1761
    %2321 = vmatpush.bf16.msra.mxu0 %v1760
    %2322 = vmatpush.bf16.msra.mxu0 %v1759
    %2323 = vmatpush.bf16.msra.mxu0 %v1758
    %2324 = vmatpush.bf16.msra.mxu0 %v1757
    %2325 = vmatpush.bf16.msra.mxu0 %v1756
    %2326 = vmatmul.bf16.gmra.mxu0 %v118
    %v2327 = vpop.f32.mrf.mxu0
    %v2328 = vadd.f32 %v2315, %v2327
    %v2329 = vpop.f32.mrf.mxu0
    %2330 = vdwg.mxu0
    %2331 = vmatpush.bf16.msra.mxu0 %v1771
    %2332 = vmatpush.bf16.msra.mxu0 %v1770
    %2333 = vmatpush.bf16.msra.mxu0 %v1769
    %2334 = vmatpush.bf16.msra.mxu0 %v1768
    %2335 = vmatpush.bf16.msra.mxu0 %v1767
    %2336 = vmatpush.bf16.msra.mxu0 %v1766
    %2337 = vmatpush.bf16.msra.mxu0 %v1765
    %2338 = vmatpush.bf16.msra.mxu0 %v1764
    %2339 = vmatmul.bf16.gmra.mxu0 %v119
    %v2340 = vpop.f32.mrf.mxu0
    %v2341 = vadd.f32 %v2328, %v2340
    %v2342 = vpop.f32.mrf.mxu0
    %2343 = vdwg.mxu0
    %2344 = vmatpush.bf16.msra.mxu0 %v1779
    %2345 = vmatpush.bf16.msra.mxu0 %v1778
    %2346 = vmatpush.bf16.msra.mxu0 %v1777
    %2347 = vmatpush.bf16.msra.mxu0 %v1776
    %2348 = vmatpush.bf16.msra.mxu0 %v1775
    %2349 = vmatpush.bf16.msra.mxu0 %v1774
    %2350 = vmatpush.bf16.msra.mxu0 %v1773
    %2351 = vmatpush.bf16.msra.mxu0 %v1772
    %2352 = vmatmul.bf16.gmra.mxu0 %v120
    %v2353 = vpop.f32.mrf.mxu0
    %v2354 = vadd.f32 %v2341, %v2353
    %v2355 = vpop.f32.mrf.mxu0
    %2356 = vdwg.mxu0
    %2357 = vmatpush.bf16.msra.mxu0 %v1787
    %2358 = vmatpush.bf16.msra.mxu0 %v1786
    %2359 = vmatpush.bf16.msra.mxu0 %v1785
    %2360 = vmatpush.bf16.msra.mxu0 %v1784
    %2361 = vmatpush.bf16.msra.mxu0 %v1783
    %2362 = vmatpush.bf16.msra.mxu0 %v1782
    %2363 = vmatpush.bf16.msra.mxu0 %v1781
    %2364 = vmatpush.bf16.msra.mxu0 %v1780
    %2365 = vmatmul.bf16.gmra.mxu0 %v121
    %v2366 = vpop.f32.mrf.mxu0
    %v2367 = vadd.f32 %v2354, %v2366
    %v2368 = vpop.f32.mrf.mxu0
    %2369 = vdwg.mxu0
    %2370 = vmatpush.bf16.msra.mxu0 %v1795
    %2371 = vmatpush.bf16.msra.mxu0 %v1794
    %2372 = vmatpush.bf16.msra.mxu0 %v1793
    %2373 = vmatpush.bf16.msra.mxu0 %v1792
    %2374 = vmatpush.bf16.msra.mxu0 %v1791
    %2375 = vmatpush.bf16.msra.mxu0 %v1790
    %2376 = vmatpush.bf16.msra.mxu0 %v1789
    %2377 = vmatpush.bf16.msra.mxu0 %v1788
    %2378 = vmatmul.bf16.gmra.mxu0 %v122
    %v2379 = vpop.f32.mrf.mxu0
    %v2380 = vadd.f32 %v2367, %v2379
    %v2381 = vpop.f32.mrf.mxu0
    %2382 = vdwg.mxu0
    %2383 = vmatpush.bf16.msra.mxu0 %v1803
    %2384 = vmatpush.bf16.msra.mxu0 %v1802
    %2385 = vmatpush.bf16.msra.mxu0 %v1801
    %2386 = vmatpush.bf16.msra.mxu0 %v1800
    %2387 = vmatpush.bf16.msra.mxu0 %v1799
    %2388 = vmatpush.bf16.msra.mxu0 %v1798
    %2389 = vmatpush.bf16.msra.mxu0 %v1797
    %2390 = vmatpush.bf16.msra.mxu0 %v1796
    %2391 = vmatmul.bf16.gmra.mxu0 %v123
    %v2392 = vpop.f32.mrf.mxu0
    %v2393 = vadd.f32 %v2380, %v2392
    %v2394 = vpop.f32.mrf.mxu0
    %2395 = vdwg.mxu0
    %2396 = vmatpush.bf16.msra.mxu0 %v1811
    %2397 = vmatpush.bf16.msra.mxu0 %v1810
    %2398 = vmatpush.bf16.msra.mxu0 %v1809
    %2399 = vmatpush.bf16.msra.mxu0 %v1808
    %2400 = vmatpush.bf16.msra.mxu0 %v1807
    %2401 = vmatpush.bf16.msra.mxu0 %v1806
    %2402 = vmatpush.bf16.msra.mxu0 %v1805
    %2403 = vmatpush.bf16.msra.mxu0 %v1804
    %2404 = vmatmul.bf16.gmra.mxu0 %v124
    %v2405 = vpop.f32.mrf.mxu0
    %v2406 = vadd.f32 %v2393, %v2405
    %v2407 = vpop.f32.mrf.mxu0
    %2408 = vdwg.mxu0
    %2409 = vmatpush.bf16.msra.mxu0 %v1819
    %2410 = vmatpush.bf16.msra.mxu0 %v1818
    %2411 = vmatpush.bf16.msra.mxu0 %v1817
    %2412 = vmatpush.bf16.msra.mxu0 %v1816
    %2413 = vmatpush.bf16.msra.mxu0 %v1815
    %2414 = vmatpush.bf16.msra.mxu0 %v1814
    %2415 = vmatpush.bf16.msra.mxu0 %v1813
    %2416 = vmatpush.bf16.msra.mxu0 %v1812
    %2417 = vmatmul.bf16.gmra.mxu0 %v125
    %v2418 = vpop.f32.mrf.mxu0
    %v2419 = vadd.f32 %v2406, %v2418
    %v2420 = vpop.f32.mrf.mxu0
    %2421 = vdwg.mxu0
    %2422 = vmatpush.bf16.msra.mxu0 %v1827
    %2423 = vmatpush.bf16.msra.mxu0 %v1826
    %2424 = vmatpush.bf16.msra.mxu0 %v1825
    %2425 = vmatpush.bf16.msra.mxu0 %v1824
    %2426 = vmatpush.bf16.msra.mxu0 %v1823
    %2427 = vmatpush.bf16.msra.mxu0 %v1822
    %2428 = vmatpush.bf16.msra.mxu0 %v1821
    %2429 = vmatpush.bf16.msra.mxu0 %v1820
    %2430 = vmatmul.bf16.gmra.mxu0 %v126
    %v2431 = vpop.f32.mrf.mxu0
    %v2432 = vadd.f32 %v2419, %v2431
    %v2433 = vpop.f32.mrf.mxu0
    %2434 = vdwg.mxu0
    %2435 = vmatpush.bf16.msra.mxu0 %v1835
    %2436 = vmatpush.bf16.msra.mxu0 %v1834
    %2437 = vmatpush.bf16.msra.mxu0 %v1833
    %2438 = vmatpush.bf16.msra.mxu0 %v1832
    %2439 = vmatpush.bf16.msra.mxu0 %v1831
    %2440 = vmatpush.bf16.msra.mxu0 %v1830
    %2441 = vmatpush.bf16.msra.mxu0 %v1829
    %2442 = vmatpush.bf16.msra.mxu0 %v1828
    %2443 = vmatmul.bf16.gmra.mxu0 %v127
    %v2444 = vpop.f32.mrf.mxu0
    %v2445 = vadd.f32 %v2432, %v2444
    %v2446 = vpop.f32.mrf.mxu0
    %2447 = vdwg.mxu0
    %2448 = vmatpush.bf16.msra.mxu0 %v1843
    %2449 = vmatpush.bf16.msra.mxu0 %v1842
    %2450 = vmatpush.bf16.msra.mxu0 %v1841
    %2451 = vmatpush.bf16.msra.mxu0 %v1840
    %2452 = vmatpush.bf16.msra.mxu0 %v1839
    %2453 = vmatpush.bf16.msra.mxu0 %v1838
    %2454 = vmatpush.bf16.msra.mxu0 %v1837
    %2455 = vmatpush.bf16.msra.mxu0 %v1836
    %2456 = vmatmul.bf16.gmra.mxu0 %v128
    %v2457 = vpop.f32.mrf.mxu0
    %v2458 = vadd.f32 %v2445, %v2457
    %v2459 = vpop.f32.mrf.mxu0
    %2460 = vdwg.mxu0
    %2461 = vmatpush.bf16.msra.mxu0 %v1851
    %2462 = vmatpush.bf16.msra.mxu0 %v1850
    %2463 = vmatpush.bf16.msra.mxu0 %v1849
    %2464 = vmatpush.bf16.msra.mxu0 %v1848
    %2465 = vmatpush.bf16.msra.mxu0 %v1847
    %2466 = vmatpush.bf16.msra.mxu0 %v1846
    %2467 = vmatpush.bf16.msra.mxu0 %v1845
    %2468 = vmatpush.bf16.msra.mxu0 %v1844
    %2469 = vmatmul.bf16.gmra.mxu0 %v129
    %v2470 = vpop.f32.mrf.mxu0
    %v2471 = vadd.f32 %v2458, %v2470
    %v2472 = vpop.f32.mrf.mxu0
    %2473 = vdwg.mxu0
    %2474 = vmatpush.bf16.msra.mxu0 %v1859
    %2475 = vmatpush.bf16.msra.mxu0 %v1858
    %2476 = vmatpush.bf16.msra.mxu0 %v1857
    %2477 = vmatpush.bf16.msra.mxu0 %v1856
    %2478 = vmatpush.bf16.msra.mxu0 %v1855
    %2479 = vmatpush.bf16.msra.mxu0 %v1854
    %2480 = vmatpush.bf16.msra.mxu0 %v1853
    %2481 = vmatpush.bf16.msra.mxu0 %v1852
    %2482 = vmatmul.bf16.gmra.mxu0 %v130
    %v2483 = vpop.f32.mrf.mxu0
    %v2484 = vadd.f32 %v2471, %v2483
    %v2485 = vpop.f32.mrf.mxu0
    %2486 = vdwg.mxu0
    %2487 = vmatpush.bf16.msra.mxu0 %v1867
    %2488 = vmatpush.bf16.msra.mxu0 %v1866
    %2489 = vmatpush.bf16.msra.mxu0 %v1865
    %2490 = vmatpush.bf16.msra.mxu0 %v1864
    %2491 = vmatpush.bf16.msra.mxu0 %v1863
    %2492 = vmatpush.bf16.msra.mxu0 %v1862
    %2493 = vmatpush.bf16.msra.mxu0 %v1861
    %2494 = vmatpush.bf16.msra.mxu0 %v1860
    %2495 = vmatmul.bf16.gmra.mxu0 %v131
    %v2496 = vpop.f32.mrf.mxu0
    %v2497 = vadd.f32 %v2484, %v2496
    %v2498 = vpop.f32.mrf.mxu0
    %2499 = vdwg.mxu0
    %2500 = vmatpush.bf16.msra.mxu0 %v1875
    %2501 = vmatpush.bf16.msra.mxu0 %v1874
    %2502 = vmatpush.bf16.msra.mxu0 %v1873
    %2503 = vmatpush.bf16.msra.mxu0 %v1872
    %2504 = vmatpush.bf16.msra.mxu0 %v1871
    %2505 = vmatpush.bf16.msra.mxu0 %v1870
    %2506 = vmatpush.bf16.msra.mxu0 %v1869
    %2507 = vmatpush.bf16.msra.mxu0 %v1868
    %2508 = vmatmul.bf16.gmra.mxu0 %v132
    %v2509 = vpop.f32.mrf.mxu0
    %v2510 = vadd.f32 %v2497, %v2509
    %v2511 = vpop.f32.mrf.mxu0
    %2512 = vdwg.mxu0
    %2513 = vmatpush.bf16.msra.mxu0 %v1883
    %2514 = vmatpush.bf16.msra.mxu0 %v1882
    %2515 = vmatpush.bf16.msra.mxu0 %v1881
    %2516 = vmatpush.bf16.msra.mxu0 %v1880
    %2517 = vmatpush.bf16.msra.mxu0 %v1879
    %2518 = vmatpush.bf16.msra.mxu0 %v1878
    %2519 = vmatpush.bf16.msra.mxu0 %v1877
    %2520 = vmatpush.bf16.msra.mxu0 %v1876
    %2521 = vmatmul.bf16.gmra.mxu0 %v133
    %v2522 = vpop.f32.mrf.mxu0
    %v2523 = vadd.f32 %v2510, %v2522
    %v2524 = vpop.f32.mrf.mxu0
    %2525 = vdwg.mxu0
    %2526 = vmatpush.bf16.msra.mxu0 %v1891
    %2527 = vmatpush.bf16.msra.mxu0 %v1890
    %2528 = vmatpush.bf16.msra.mxu0 %v1889
    %2529 = vmatpush.bf16.msra.mxu0 %v1888
    %2530 = vmatpush.bf16.msra.mxu0 %v1887
    %2531 = vmatpush.bf16.msra.mxu0 %v1886
    %2532 = vmatpush.bf16.msra.mxu0 %v1885
    %2533 = vmatpush.bf16.msra.mxu0 %v1884
    %2534 = vmatmul.bf16.gmra.mxu0 %v134
    %v2535 = vpop.f32.mrf.mxu0
    %v2536 = vadd.f32 %v2523, %v2535
    %v2537 = vpop.f32.mrf.mxu0
    %2538 = vdwg.mxu0
    %2539 = vmatpush.bf16.msra.mxu0 %v1899
    %2540 = vmatpush.bf16.msra.mxu0 %v1898
    %2541 = vmatpush.bf16.msra.mxu0 %v1897
    %2542 = vmatpush.bf16.msra.mxu0 %v1896
    %2543 = vmatpush.bf16.msra.mxu0 %v1895
    %2544 = vmatpush.bf16.msra.mxu0 %v1894
    %2545 = vmatpush.bf16.msra.mxu0 %v1893
    %2546 = vmatpush.bf16.msra.mxu0 %v1892
    %2547 = vmatmul.bf16.gmra.mxu0 %v135
    %v2548 = vpop.f32.mrf.mxu0
    %v2549 = vadd.f32 %v2536, %v2548
    %v2550 = vpop.f32.mrf.mxu0
    %2551 = vdwg.mxu0
    %2552 = vmatpush.bf16.msra.mxu0 %v1907
    %2553 = vmatpush.bf16.msra.mxu0 %v1906
    %2554 = vmatpush.bf16.msra.mxu0 %v1905
    %2555 = vmatpush.bf16.msra.mxu0 %v1904
    %2556 = vmatpush.bf16.msra.mxu0 %v1903
    %2557 = vmatpush.bf16.msra.mxu0 %v1902
    %2558 = vmatpush.bf16.msra.mxu0 %v1901
    %2559 = vmatpush.bf16.msra.mxu0 %v1900
    %2560 = vmatmul.bf16.gmra.mxu0 %v136
    %v2561 = vpop.f32.mrf.mxu0
    %v2562 = vadd.f32 %v2549, %v2561
    %v2563 = vpop.f32.mrf.mxu0
    %2564 = vdwg.mxu0
    %2565 = vmatpush.bf16.msra.mxu0 %v1915
    %2566 = vmatpush.bf16.msra.mxu0 %v1914
    %2567 = vmatpush.bf16.msra.mxu0 %v1913
    %2568 = vmatpush.bf16.msra.mxu0 %v1912
    %2569 = vmatpush.bf16.msra.mxu0 %v1911
    %2570 = vmatpush.bf16.msra.mxu0 %v1910
    %2571 = vmatpush.bf16.msra.mxu0 %v1909
    %2572 = vmatpush.bf16.msra.mxu0 %v1908
    %2573 = vmatmul.bf16.gmra.mxu0 %v137
    %v2574 = vpop.f32.mrf.mxu0
    %v2575 = vadd.f32 %v2562, %v2574
    %v2576 = vpop.f32.mrf.mxu0
    %2577 = vdwg.mxu0
    %2578 = vmatpush.bf16.msra.mxu0 %v1923
    %2579 = vmatpush.bf16.msra.mxu0 %v1922
    %2580 = vmatpush.bf16.msra.mxu0 %v1921
    %2581 = vmatpush.bf16.msra.mxu0 %v1920
    %2582 = vmatpush.bf16.msra.mxu0 %v1919
    %2583 = vmatpush.bf16.msra.mxu0 %v1918
    %2584 = vmatpush.bf16.msra.mxu0 %v1917
    %2585 = vmatpush.bf16.msra.mxu0 %v1916
    %2586 = vmatmul.bf16.gmra.mxu0 %v138
    %v2587 = vpop.f32.mrf.mxu0
    %v2588 = vadd.f32 %v2575, %v2587
    %v2589 = vpop.f32.mrf.mxu0
    %2590 = vdwg.mxu0
    %2591 = vmatpush.bf16.msra.mxu0 %v1931
    %2592 = vmatpush.bf16.msra.mxu0 %v1930
    %2593 = vmatpush.bf16.msra.mxu0 %v1929
    %2594 = vmatpush.bf16.msra.mxu0 %v1928
    %2595 = vmatpush.bf16.msra.mxu0 %v1927
    %2596 = vmatpush.bf16.msra.mxu0 %v1926
    %2597 = vmatpush.bf16.msra.mxu0 %v1925
    %2598 = vmatpush.bf16.msra.mxu0 %v1924
    %2599 = vmatmul.bf16.gmra.mxu0 %v139
    %v2600 = vpop.f32.mrf.mxu0
    %v2601 = vadd.f32 %v2588, %v2600
    %v2602 = vpop.f32.mrf.mxu0
    %2603 = vdwg.mxu0
    %v2604 = vpack.c.bf16 %v2601, %v2601
    %2605 = vst [vmem:[%s66] sm:$0xf] %v2604
    %s2606 = sadd.s32 0, 0
    %s2607 = smul.u32 %s2606, 8
    %v2608 = vlaneseq
    %v2609 = vshrl.u32 %v2608, 7
    %v2610 = vstv %s2607
    %v2611 = vadd.s32 %v2610, %v2609
    %p2612 = scmp.lt.s32.totalorder %s2606, 1
    %vm2613 = vcmp.lt.s32.totalorder %v2611, 8
    %s2614 = scalar_select %p2612, 1, 0
    %v2615 = vstv %s2614
    %vm2616 = vcmp.eq.s32.totalorder %v2615, 1
    %vm2617 = vmand %vm2616, %vm2613
    %v2618 = vsel %vm2617, 1, 0
    %vm2619 = vcmp.eq.s32.totalorder %v2618, 1
    %v2620 = vsel %vm2619, %v2601, 0.0
    %v2621 = vld [vmem:[%s3] sm:$0x1]
    %v2622 = vrot.slane %v2620, 4
    %v2623 = vadd.f32 %v2620, %v2622
    %v2624 = vrot.slane %v2623, 2
    %v2625 = vadd.f32 %v2623, %v2624
    %v2626 = vrot.slane %v2625, 1
    %v2627 = vadd.f32 %v2625, %v2626
    %v2628 = vadd.f32 %v2621, %v2627
    %2629 = vst [vmem:[%s3] sm:$0x1] %v2628
    %v2630 = vld [vmem:[%s4] sm:$0x1]
    %v2631 = vmul.f32 %v2620, %v2620
    %v2632 = vrot.slane %v2631, 4
    %v2633 = vadd.f32 %v2631, %v2632
    %v2634 = vrot.slane %v2633, 2
    %v2635 = vadd.f32 %v2633, %v2634
    %v2636 = vrot.slane %v2635, 1
    %v2637 = vadd.f32 %v2635, %v2636
    %v2638 = vadd.f32 %v2630, %v2637
    %2639 = vst [vmem:[%s4] sm:$0x1] %v2638
    %s2640 = sadd.s32 0, 0
    %p2641 = scmp.lt.s32.totalorder %s2640, 0
    %s2642 = scalar_select %p2641, %s2640, 0
    %p2643 = scmp.lt.s32.totalorder %s2642, 0
    %s2644 = scalar_select %p2643, %s2642, 0
    %s2645 = smul.addr %s2644, 4
    %s2646 = scalar_lea.vmem %s2, %s2645
    // Predicated region
    $region22: #{recognition_forward.2} parent=1 // pred_check
      _
    $region23: #{recognition_forward.2} parent=1 // pred_check_branch
      %2648 = sbr.rel (0) target = $region25
    $region24: #{recognition_forward.2} parent=1 // pred_region
      %s2649 = sadd.s32 0, 0
      %p2650 = scmp.lt.s32.totalorder %s2649, 0
      %s2651 = scalar_select %p2650, %s2649, 0
    $region25: #{recognition_forward.2} parent=1 // pred_fallthru
      _
    // Predicated region
    $region26: #{recognition_forward.2} parent=1 // pred_check
      _
    $region27: #{recognition_forward.2} parent=1 // pred_check_branch
      %2653 = sbr.rel (0) target = $region29
    $region28: #{recognition_forward.2} parent=1 // pred_region
      _
    $region29: #{recognition_forward.2} parent=1 // pred_fallthru
      _
    // Predicated region
    $region30: #{recognition_forward.2} parent=1 // pred_check
      _
    $region31: #{recognition_forward.2} parent=1 // pred_check_branch
      %2655 = sbr.rel (0) target = $region33
    $region32: #{recognition_forward.2} parent=1 // pred_region
      _
    $region33: #{recognition_forward.2} parent=1 // pred_fallthru
      _
    // Predicated region
    $region34: #{recognition_forward.2} parent=1 // pred_check
      _
    $region35: #{recognition_forward.2} parent=1 // pred_check_branch
      %2657 = sbr.rel (0) target = $region37
    $region36: #{recognition_forward.2} parent=1 // pred_region
      %s2658 = sadd.s32 0, 0
      %p2659 = scmp.lt.s32.totalorder %s2658, 0
      %s2660 = scalar_select %p2659, %s2658, 0
      %p2661 = scmp.lt.s32.totalorder %s2660, 0
      %s2662 = scalar_select %p2661, %s2660, 0
      %s2663 = smul.addr %s2662, 4
      %s2664 = scalar_lea.vmem %s2, %s2663
    $region37: #{recognition_forward.2} parent=1 // pred_fallthru
      _
    // Predicated region
    $region38: #{recognition_forward.2} parent=1 // pred_check
      _
    $region39: #{recognition_forward.2} parent=1 // pred_check_branch
      %2666 = sbr.rel (0) target = $region41
    $region40: #{recognition_forward.2} parent=1 // pred_region
      _
    $region41: #{recognition_forward.2} parent=1 // pred_fallthru
      _
    // Predicated region
    $region42: #{recognition_forward.2} parent=1 // pred_check
      _
    $region43: #{recognition_forward.2} parent=1 // pred_check_branch
      %2668 = sbr.rel (0) target = $region45
    $region44: #{recognition_forward.2} parent=1 // pred_region
      _
    $region45: #{recognition_forward.2} parent=1 // pred_fallthru
      _
    %2669 = vsyncpa [#allocation3], 1
    %2670 = vsyncpa [#allocation5], 1

</llo_original>
